<compile_context>
chip_gen: v6e
topology: v6e:2x2x1
jax: 0.10.0
libtpu: 0.0.40
codegen_flags: <defaults>
</compile_context>

<pallas_src>
import functools
import math

import jax
import jax.numpy as jnp
from jax.experimental import pallas as pl
from jax.experimental.pallas import tpu as pltpu


# ---------------------------------------------------------------------------
# Fused kernel: conv + ReLU + LPPool + depth Fourier blocks + dense head
# ---------------------------------------------------------------------------

def nfed_kernel(x_ref, cw_ref, cb_ref,
                m_ref, bf_ref, g1_ref, be1_ref, g2_ref, be2_ref,
                w1_ref, b1_ref, w2_ref, b2_ref,
                d1w_ref, d1b_ref, d2w_ref, d2b_ref, ow_ref, ob_ref,
                o_ref, *, ksize, seq_len, batch_tile, c2_dim, depth,
                pad_left, pad_right):
    """Whole NFED forward for one batch tile.

    x_ref   : (batch_tile, seq_len)  raw input tile (VMEM)
    cw_ref  : (C, ksize)  Conv1d weight (SMEM, scalar reads)
    cb_ref  : (C,)        Conv1d bias   (SMEM)
    m_ref   : (depth, D, D)  fused DFT (+) Linear(2D->D) weight, bf16
    d1w_ref : (C2, D, C)     dense1 weight split per pooled channel, bf16
    o_ref   : (batch_tile, 1)
    """
    eps = 1e-5
    L, B, C2 = seq_len, batch_tile, c2_dim
    x_in = x_ref[...]                                        # (B, L) f32

    # In-kernel 'same' zero padding (matches the module's ZeroPad2d(left, right):
    # left = k//2, right = k//2 - 1 for even k).
    parts = []
    if pad_left:
        parts.append(jnp.zeros((B, pad_left), jnp.float32))
    parts.append(x_in)
    if pad_right:
        parts.append(jnp.zeros((B, pad_right), jnp.float32))
    xp = jnp.concatenate(parts, axis=1) if len(parts) > 1 else x_in

    # Hoisted conv input shifts: computed once, reused by every conv channel.
    shifts = [xp[:, j:j + L] for j in range(ksize)]

    # Conv1d(1, C, k) + ReLU (Dropout = identity, eval mode), then
    # LPPool1d(norm_type=2, kernel=2, stride=2) across adjacent channel pairs
    # (channels are the pooled axis after the module's transpose).
    # Pooled channels are stacked channel-major on the row (sublane) axis so the
    # Fourier stack below runs ONCE with M = C2 * batch_tile rows.
    pooled = []
    for c2 in range(C2):
        a0 = jnp.zeros((B, L), jnp.float32)
        a1 = jnp.zeros((B, L), jnp.float32)
        for j in range(ksize):
            s = shifts[j]                                    # reused lane-shifted view
            a0 = a0 + cw_ref[2 * c2, j] * s
            a1 = a1 + cw_ref[2 * c2 + 1, j] * s
        y0 = jnp.maximum(a0 + cb_ref[2 * c2], 0.0)
        y1 = jnp.maximum(a1 + cb_ref[2 * c2 + 1], 0.0)
        pooled.append(jnp.sqrt(y0 * y0 + y1 * y1))           # (B, L)
    x = jnp.concatenate(pooled, axis=0)                      # (C2*B, D), channel-major

    # `depth` FourierBLocks (mode='fft', leaky_relu=False, eval), run once on the
    # stacked matrix.  Matmul operands in bf16, f32 accumulation; LN math in f32.
    # (Unrolled: demo depth == 2.  At production depth switch to lax.fori_loop with
    #  dynamic m_ref[d]/w1_ref[d]/... indexing to bound vreg live ranges.)
    for d in range(depth):
        mu = jnp.mean(x, axis=-1, keepdims=True)
        var = jnp.mean(jnp.square(x - mu), axis=-1, keepdims=True)
        xn = (x - mu) * jax.lax.rsqrt(var + eps) * g1_ref[d] + be1_ref[d]
        # fft -> cat(real, imag) -> Linear(2D, D), pre-fused into one DxD matmul.
        fft_lin = jnp.dot(xn.astype(jnp.bfloat16), m_ref[d],
                          preferred_element_type=jnp.float32) + bf_ref[d]
        x2 = x + fft_lin
        mu2 = jnp.mean(x2, axis=-1, keepdims=True)
        var2 = jnp.mean(jnp.square(x2 - mu2), axis=-1, keepdims=True)
        xn2 = (x2 - mu2) * jax.lax.rsqrt(var2 + eps) * g2_ref[d] + be2_ref[d]
        h = jnp.maximum(
            jnp.dot(xn2.astype(jnp.bfloat16), w1_ref[d],
                    preferred_element_type=jnp.float32) + b1_ref[d], 0.0)
        x = xn2 + jnp.dot(h.astype(jnp.bfloat16), w2_ref[d],
                          preferred_element_type=jnp.float32) + b2_ref[d]

    # dense1: torch Flatten order is (batch, c2*D + d); with channel-major row
    # stacking this is a sum of C2 row-block matmuls against the per-channel
    # (D, C) weight slices (layout-safe: no sublane->lane reshape needed).
    C = d1b_ref.shape[-1]
    acc = jnp.zeros((B, C), jnp.float32)
    for c2 in range(C2):
        xc = x[c2 * B:(c2 + 1) * B, :]
        acc = acc + jnp.dot(xc.astype(jnp.bfloat16), d1w_ref[c2],
                            preferred_element_type=jnp.float32)

    # Dense head (LinearDropRelu x2 + output Linear); dropout = identity.
    h1 = jnp.maximum(acc + d1b_ref[...], 0.0)
    h2 = jnp.maximum(
        jnp.dot(h1.astype(jnp.bfloat16), d2w_ref[...],
                preferred_element_type=jnp.float32) + d2b_ref[...], 0.0)
    o_ref[...] = (jnp.dot(h2.astype(jnp.bfloat16), ow_ref[...],
                          preferred_element_type=jnp.float32) + ob_ref[...])


# ---------------------------------------------------------------------------
# Parameters (deterministic, synthetic)
# ---------------------------------------------------------------------------

def init_params(key, *, kernel_size, cnn_dim, input_dim, hidden_dim, depth):
    C, C2, D, H = cnn_dim, cnn_dim // 2, input_dim, hidden_dim
    keys = iter(jax.random.split(key, 8 + 7 * depth))

    def nrm(shape, scale=0.1):
        return jax.random.normal(next(keys), shape, jnp.float32) * scale

    # Real-input DFT matrices: X[m] = sum_n x[n] * (cos - i*sin)(2*pi*n*m/D).
    n = jnp.arange(D, dtype=jnp.float32)
    ang = 2.0 * math.pi * jnp.outer(n, n) / float(D)
    dft_real = jnp.cos(ang)
    dft_imag = -jnp.sin(ang)

    m_l, bf_l, w1_l, b1_l, w2_l, b2_l = [], [], [], [], [], []
    for _ in range(depth):
        wf_r = nrm((D, D))       # Linear(2D -> D) weight, real half, (in, out) layout
        wf_i = nrm((D, D))       # imag half
        # Host-side algebraic fusion of DFT + linear_fftout (f32 precompute):
        #   xn@dft_r@wf_r + xn@dft_i@wf_i == xn @ (dft_r@wf_r + dft_i@wf_i)
        m_l.append(jnp.dot(dft_real, wf_r) + jnp.dot(dft_imag, wf_i))
        bf_l.append(nrm((1, D)))
        w1_l.append(nrm((D, H)))
        b1_l.append(nrm((1, H)))
        w2_l.append(nrm((H, D)))
        b2_l.append(nrm((1, D)))

    bf16 = jnp.bfloat16
    return dict(
        conv_w=nrm((C, kernel_size)),            # Conv1d(1, C, k) weight (SMEM)
        conv_b=nrm((C,)),
        m=jnp.stack(m_l).astype(bf16), bf=jnp.stack(bf_l),
        g1=jnp.ones((depth, 1, D), jnp.float32),
        be1=jnp.zeros((depth, 1, D), jnp.float32),
        g2=jnp.ones((depth, 1, D), jnp.float32),
        be2=jnp.zeros((depth, 1, D), jnp.float32),
        w1=jnp.stack(w1_l).astype(bf16), b1=jnp.stack(b1_l),
        w2=jnp.stack(w2_l).astype(bf16), b2=jnp.stack(b2_l),
        d1w=nrm((C2, D, C)).astype(bf16), d1b=nrm((1, C)),   # dense1 (per channel)
        d2w=nrm((C, C2)).astype(bf16), d2b=nrm((1, C2)),     # dense2
        ow=nrm((C2, 1)).astype(bf16), ob=nrm((1, 1)),        # output Linear
    )


# ---------------------------------------------------------------------------
# Forward pass: one pallas_call for the whole network
# ---------------------------------------------------------------------------

def _pick_batch_tile(B, C2):
    # Aim for ~256 stacked matmul rows (C2 * tb) per grid step; the tile must be a
    # divisor of B and either equal B or a multiple of 8 (sublane constraint).
    target = max(1, 256 // max(C2, 1))
    cands = [d for d in range(1, min(B, target) + 1)
             if B % d == 0 and (d == B or d % 8 == 0)]
    tb = max(cands) if cands else B
    # Prefer >= 2 grid steps (v7x has 2 TensorCores) when the halved tile is still
    # a multiple of 8 rows.
    if B // tb < 2 and (B // 2) % 8 == 0 and (B // 2) > 0:
        tb = B // 2
    return tb


def nfed_forward(x, params, *, kernel_size, cnn_dim, input_dim, depth):
    B, L = x.shape
    assert L == input_dim
    k = kernel_size
    left = k // 2
    right = k // 2 - (1 if k % 2 == 0 else 0)   # matches the module's ZeroPad2d
    C2 = cnn_dim // 2

    tb = _pick_batch_tile(B, C2)

    weight_args = (params['m'], params['bf'], params['g1'], params['be1'],
                   params['g2'], params['be2'], params['w1'], params['b1'],
                   params['w2'], params['b2'], params['d1w'], params['d1b'],
                   params['d2w'], params['d2b'], params['ow'], params['ob'])

    def pinned(a):
        # Whole array resident in VMEM; same (zero) block index every grid step so
        # it is never re-DMA'd.  (At production D/H/depth on v7x: keep bf16 and add
        # pipeline_mode=pl.Buffered(1) so the pinned stacks fit the 64 MiB VMEM.)
        return pl.BlockSpec(a.shape, lambda b, _nd=a.ndim: (0,) * _nd)

    in_specs = (
        [pl.BlockSpec((tb, L), lambda b: (b, 0))]                      # raw input tile
        + [pl.BlockSpec(memory_space=pltpu.MemorySpace.SMEM)] * 2      # conv_w, conv_b
        + [pinned(a) for a in weight_args]
    )

    # Per-generation VMEM budget: ~3/4 of physical VMEM (~96 MiB on v5e/v6e,
    # ~48 MiB on v7x's 64 MiB), conservative fallback if the query is unavailable.
    try:
        vmem_cap = int(pltpu.get_tpu_info().vmem_capacity_bytes)
        vmem_limit = min((vmem_cap * 3) // 4, 112 * 1024 * 1024)
    except Exception:
        vmem_limit = 32 * 1024 * 1024

    kernel = functools.partial(nfed_kernel, ksize=k, seq_len=L, batch_tile=tb,
                               c2_dim=C2, depth=depth, pad_left=left,
                               pad_right=right)

    return pl.pallas_call(
        kernel,
        out_shape=jax.ShapeDtypeStruct((B, 1), jnp.float32),
        grid=(B // tb,),
        in_specs=in_specs,
        out_specs=pl.BlockSpec((tb, 1), lambda b: (b, 0)),
        compiler_params=pltpu.CompilerParams(
            dimension_semantics=("parallel",),
            vmem_limit_bytes=int(vmem_limit)),
    )(x, params['conv_w'], params['conv_b'], *weight_args)


# ---------------------------------------------------------------------------
# main
# ---------------------------------------------------------------------------

if __name__ == "__main__":
    B = 2
    depth = 2
    kernel_size = 5
    cnn_dim = 8
    input_dim = 16
    hidden_dim = 32

    key = jax.random.PRNGKey(0)
    kx, kp = jax.random.split(key)
    x = jax.random.normal(kx, (B, input_dim), jnp.float32)
    params = init_params(kp, kernel_size=kernel_size, cnn_dim=cnn_dim,
                         input_dim=input_dim, hidden_dim=hidden_dim, depth=depth)

    fwd = jax.jit(functools.partial(nfed_forward, kernel_size=kernel_size,
                                    cnn_dim=cnn_dim, input_dim=input_dim,
                                    depth=depth))
    out = fwd(x, params)
    jax.block_until_ready(out)
    assert out.shape == (B, 1)
    print("KERNEL_OK")
</pallas_src>

<mosaic_0001>
module attributes {stable_mosaic.version = 11 : i64} {
  func.func @nfed_kernel(%arg0: i32, %arg1: memref<2x16xf32, #tpu.memory_space<vmem>>, %arg2: memref<8x5xf32, #tpu.memory_space<smem>>, %arg3: memref<8xf32, #tpu.memory_space<smem>>, %arg4: memref<2x16x16xbf16, #tpu.memory_space<vmem>>, %arg5: memref<2x1x16xf32, #tpu.memory_space<vmem>>, %arg6: memref<2x1x16xf32, #tpu.memory_space<vmem>>, %arg7: memref<2x1x16xf32, #tpu.memory_space<vmem>>, %arg8: memref<2x1x16xf32, #tpu.memory_space<vmem>>, %arg9: memref<2x1x16xf32, #tpu.memory_space<vmem>>, %arg10: memref<2x16x32xbf16, #tpu.memory_space<vmem>>, %arg11: memref<2x1x32xf32, #tpu.memory_space<vmem>>, %arg12: memref<2x32x16xbf16, #tpu.memory_space<vmem>>, %arg13: memref<2x1x16xf32, #tpu.memory_space<vmem>>, %arg14: memref<4x16x8xbf16, #tpu.memory_space<vmem>>, %arg15: memref<1x8xf32, #tpu.memory_space<vmem>>, %arg16: memref<8x4xbf16, #tpu.memory_space<vmem>>, %arg17: memref<1x4xf32, #tpu.memory_space<vmem>>, %arg18: memref<4x1xbf16, #tpu.memory_space<vmem>>, %arg19: memref<1x1xf32, #tpu.memory_space<vmem>>, %arg20: memref<2x1xf32, #tpu.memory_space<vmem>>) attributes {dimension_semantics = [#tpu.dimension_semantics<parallel>], iteration_bounds = array<i64: 1>, scalar_prefetch = 0 : i64, scratch_operands = 0 : i64, tpu.core_type = #tpu.core_type<tc>, window_params = [{transform_indices = @transform_0, window_bounds = array<i64: 2, 16>}, {transform_indices = @transform_1, window_bounds = array<i64: 8, 5>}, {transform_indices = @transform_2, window_bounds = array<i64: 8>}, {pipeline_mode = #tpu.pipeline_mode<synchronous>, transform_indices = @transform_3, window_bounds = array<i64: 2, 16, 16>}, {pipeline_mode = #tpu.pipeline_mode<synchronous>, transform_indices = @transform_4, window_bounds = array<i64: 2, 1, 16>}, {pipeline_mode = #tpu.pipeline_mode<synchronous>, transform_indices = @transform_5, window_bounds = array<i64: 2, 1, 16>}, {pipeline_mode = #tpu.pipeline_mode<synchronous>, transform_indices = @transform_6, window_bounds = array<i64: 2, 1, 16>}, {pipeline_mode = #tpu.pipeline_mode<synchronous>, transform_indices = @transform_7, window_bounds = array<i64: 2, 1, 16>}, {pipeline_mode = #tpu.pipeline_mode<synchronous>, transform_indices = @transform_8, window_bounds = array<i64: 2, 1, 16>}, {pipeline_mode = #tpu.pipeline_mode<synchronous>, transform_indices = @transform_9, window_bounds = array<i64: 2, 16, 32>}, {pipeline_mode = #tpu.pipeline_mode<synchronous>, transform_indices = @transform_10, window_bounds = array<i64: 2, 1, 32>}, {pipeline_mode = #tpu.pipeline_mode<synchronous>, transform_indices = @transform_11, window_bounds = array<i64: 2, 32, 16>}, {pipeline_mode = #tpu.pipeline_mode<synchronous>, transform_indices = @transform_12, window_bounds = array<i64: 2, 1, 16>}, {pipeline_mode = #tpu.pipeline_mode<synchronous>, transform_indices = @transform_13, window_bounds = array<i64: 4, 16, 8>}, {pipeline_mode = #tpu.pipeline_mode<synchronous>, transform_indices = @transform_14, window_bounds = array<i64: 1, 8>}, {pipeline_mode = #tpu.pipeline_mode<synchronous>, transform_indices = @transform_15, window_bounds = array<i64: 8, 4>}, {pipeline_mode = #tpu.pipeline_mode<synchronous>, transform_indices = @transform_16, window_bounds = array<i64: 1, 4>}, {pipeline_mode = #tpu.pipeline_mode<synchronous>, transform_indices = @transform_17, window_bounds = array<i64: 4, 1>}, {pipeline_mode = #tpu.pipeline_mode<synchronous>, transform_indices = @transform_18, window_bounds = array<i64: 1, 1>}, {transform_indices = @transform_19, window_bounds = array<i64: 2, 1>}]} {
    %c0 = arith.constant 0 : index
    %c0_0 = arith.constant 0 : index
    %0 = vector.load %arg1[%c0, %c0_0] : memref<2x16xf32, #tpu.memory_space<vmem>>, vector<2x16xf32>
    %cst = arith.constant 0.000000e+00 : f32
    %1 = vector.broadcast %cst : f32 to vector<2x2xf32>
    %cst_1 = arith.constant 0.000000e+00 : f32
    %2 = vector.broadcast %cst_1 : f32 to vector<2x2xf32>
    %3 = tpu.concatenate %1, %0, %2 in 1 : vector<2x2xf32>, vector<2x16xf32>, vector<2x2xf32> -> vector<2x20xf32>
    %4 = vector.extract_strided_slice %3 {offsets = [0, 0], sizes = [2, 16], strides = [1, 1]} : vector<2x20xf32> to vector<2x16xf32>
    %5 = vector.extract_strided_slice %3 {offsets = [0, 1], sizes = [2, 16], strides = [1, 1]} : vector<2x20xf32> to vector<2x16xf32>
    %6 = vector.extract_strided_slice %3 {offsets = [0, 2], sizes = [2, 16], strides = [1, 1]} : vector<2x20xf32> to vector<2x16xf32>
    %7 = vector.extract_strided_slice %3 {offsets = [0, 3], sizes = [2, 16], strides = [1, 1]} : vector<2x20xf32> to vector<2x16xf32>
    %8 = vector.extract_strided_slice %3 {offsets = [0, 4], sizes = [2, 16], strides = [1, 1]} : vector<2x20xf32> to vector<2x16xf32>
    %cst_2 = arith.constant 0.000000e+00 : f32
    %9 = vector.broadcast %cst_2 : f32 to vector<2x16xf32>
    %cst_3 = arith.constant 0.000000e+00 : f32
    %10 = vector.broadcast %cst_3 : f32 to vector<2x16xf32>
    %c0_4 = arith.constant 0 : index
    %c0_5 = arith.constant 0 : index
    %11 = memref.load %arg2[%c0_4, %c0_5] : memref<8x5xf32, #tpu.memory_space<smem>>
    %12 = vector.broadcast %11 : f32 to vector<2x16xf32>
    %13 = arith.mulf %12, %4 : vector<2x16xf32>
    %14 = arith.addf %9, %13 : vector<2x16xf32>
    %c1 = arith.constant 1 : index
    %c0_6 = arith.constant 0 : index
    %15 = memref.load %arg2[%c1, %c0_6] : memref<8x5xf32, #tpu.memory_space<smem>>
    %16 = vector.broadcast %15 : f32 to vector<2x16xf32>
    %17 = arith.mulf %16, %4 : vector<2x16xf32>
    %18 = arith.addf %10, %17 : vector<2x16xf32>
    %c0_7 = arith.constant 0 : index
    %c1_8 = arith.constant 1 : index
    %19 = memref.load %arg2[%c0_7, %c1_8] : memref<8x5xf32, #tpu.memory_space<smem>>
    %20 = vector.broadcast %19 : f32 to vector<2x16xf32>
    %21 = arith.mulf %20, %5 : vector<2x16xf32>
    %22 = arith.addf %14, %21 : vector<2x16xf32>
    %c1_9 = arith.constant 1 : index
    %c1_10 = arith.constant 1 : index
    %23 = memref.load %arg2[%c1_9, %c1_10] : memref<8x5xf32, #tpu.memory_space<smem>>
    %24 = vector.broadcast %23 : f32 to vector<2x16xf32>
    %25 = arith.mulf %24, %5 : vector<2x16xf32>
    %26 = arith.addf %18, %25 : vector<2x16xf32>
    %c0_11 = arith.constant 0 : index
    %c2 = arith.constant 2 : index
    %27 = memref.load %arg2[%c0_11, %c2] : memref<8x5xf32, #tpu.memory_space<smem>>
    %28 = vector.broadcast %27 : f32 to vector<2x16xf32>
    %29 = arith.mulf %28, %6 : vector<2x16xf32>
    %30 = arith.addf %22, %29 : vector<2x16xf32>
    %c1_12 = arith.constant 1 : index
    %c2_13 = arith.constant 2 : index
    %31 = memref.load %arg2[%c1_12, %c2_13] : memref<8x5xf32, #tpu.memory_space<smem>>
    %32 = vector.broadcast %31 : f32 to vector<2x16xf32>
    %33 = arith.mulf %32, %6 : vector<2x16xf32>
    %34 = arith.addf %26, %33 : vector<2x16xf32>
    %c0_14 = arith.constant 0 : index
    %c3 = arith.constant 3 : index
    %35 = memref.load %arg2[%c0_14, %c3] : memref<8x5xf32, #tpu.memory_space<smem>>
    %36 = vector.broadcast %35 : f32 to vector<2x16xf32>
    %37 = arith.mulf %36, %7 : vector<2x16xf32>
    %38 = arith.addf %30, %37 : vector<2x16xf32>
    %c1_15 = arith.constant 1 : index
    %c3_16 = arith.constant 3 : index
    %39 = memref.load %arg2[%c1_15, %c3_16] : memref<8x5xf32, #tpu.memory_space<smem>>
    %40 = vector.broadcast %39 : f32 to vector<2x16xf32>
    %41 = arith.mulf %40, %7 : vector<2x16xf32>
    %42 = arith.addf %34, %41 : vector<2x16xf32>
    %c0_17 = arith.constant 0 : index
    %c4 = arith.constant 4 : index
    %43 = memref.load %arg2[%c0_17, %c4] : memref<8x5xf32, #tpu.memory_space<smem>>
    %44 = vector.broadcast %43 : f32 to vector<2x16xf32>
    %45 = arith.mulf %44, %8 : vector<2x16xf32>
    %46 = arith.addf %38, %45 : vector<2x16xf32>
    %c1_18 = arith.constant 1 : index
    %c4_19 = arith.constant 4 : index
    %47 = memref.load %arg2[%c1_18, %c4_19] : memref<8x5xf32, #tpu.memory_space<smem>>
    %48 = vector.broadcast %47 : f32 to vector<2x16xf32>
    %49 = arith.mulf %48, %8 : vector<2x16xf32>
    %50 = arith.addf %42, %49 : vector<2x16xf32>
    %c0_20 = arith.constant 0 : index
    %51 = memref.load %arg3[%c0_20] : memref<8xf32, #tpu.memory_space<smem>>
    %52 = vector.broadcast %51 : f32 to vector<2x16xf32>
    %53 = arith.addf %46, %52 : vector<2x16xf32>
    %cst_21 = arith.constant 0.000000e+00 : f32
    %54 = vector.broadcast %cst_21 : f32 to vector<2x16xf32>
    %55 = arith.maximumf %53, %54 : vector<2x16xf32>
    %c1_22 = arith.constant 1 : index
    %56 = memref.load %arg3[%c1_22] : memref<8xf32, #tpu.memory_space<smem>>
    %57 = vector.broadcast %56 : f32 to vector<2x16xf32>
    %58 = arith.addf %50, %57 : vector<2x16xf32>
    %cst_23 = arith.constant 0.000000e+00 : f32
    %59 = vector.broadcast %cst_23 : f32 to vector<2x16xf32>
    %60 = arith.maximumf %58, %59 : vector<2x16xf32>
    %61 = arith.mulf %55, %55 : vector<2x16xf32>
    %62 = arith.mulf %60, %60 : vector<2x16xf32>
    %63 = arith.addf %61, %62 : vector<2x16xf32>
    %64 = math.sqrt %63 : vector<2x16xf32>
    %cst_24 = arith.constant 0.000000e+00 : f32
    %65 = vector.broadcast %cst_24 : f32 to vector<2x16xf32>
    %cst_25 = arith.constant 0.000000e+00 : f32
    %66 = vector.broadcast %cst_25 : f32 to vector<2x16xf32>
    %c2_26 = arith.constant 2 : index
    %c0_27 = arith.constant 0 : index
    %67 = memref.load %arg2[%c2_26, %c0_27] : memref<8x5xf32, #tpu.memory_space<smem>>
    %68 = vector.broadcast %67 : f32 to vector<2x16xf32>
    %69 = arith.mulf %68, %4 : vector<2x16xf32>
    %70 = arith.addf %65, %69 : vector<2x16xf32>
    %c3_28 = arith.constant 3 : index
    %c0_29 = arith.constant 0 : index
    %71 = memref.load %arg2[%c3_28, %c0_29] : memref<8x5xf32, #tpu.memory_space<smem>>
    %72 = vector.broadcast %71 : f32 to vector<2x16xf32>
    %73 = arith.mulf %72, %4 : vector<2x16xf32>
    %74 = arith.addf %66, %73 : vector<2x16xf32>
    %c2_30 = arith.constant 2 : index
    %c1_31 = arith.constant 1 : index
    %75 = memref.load %arg2[%c2_30, %c1_31] : memref<8x5xf32, #tpu.memory_space<smem>>
    %76 = vector.broadcast %75 : f32 to vector<2x16xf32>
    %77 = arith.mulf %76, %5 : vector<2x16xf32>
    %78 = arith.addf %70, %77 : vector<2x16xf32>
    %c3_32 = arith.constant 3 : index
    %c1_33 = arith.constant 1 : index
    %79 = memref.load %arg2[%c3_32, %c1_33] : memref<8x5xf32, #tpu.memory_space<smem>>
    %80 = vector.broadcast %79 : f32 to vector<2x16xf32>
    %81 = arith.mulf %80, %5 : vector<2x16xf32>
    %82 = arith.addf %74, %81 : vector<2x16xf32>
    %c2_34 = arith.constant 2 : index
    %c2_35 = arith.constant 2 : index
    %83 = memref.load %arg2[%c2_34, %c2_35] : memref<8x5xf32, #tpu.memory_space<smem>>
    %84 = vector.broadcast %83 : f32 to vector<2x16xf32>
    %85 = arith.mulf %84, %6 : vector<2x16xf32>
    %86 = arith.addf %78, %85 : vector<2x16xf32>
    %c3_36 = arith.constant 3 : index
    %c2_37 = arith.constant 2 : index
    %87 = memref.load %arg2[%c3_36, %c2_37] : memref<8x5xf32, #tpu.memory_space<smem>>
    %88 = vector.broadcast %87 : f32 to vector<2x16xf32>
    %89 = arith.mulf %88, %6 : vector<2x16xf32>
    %90 = arith.addf %82, %89 : vector<2x16xf32>
    %c2_38 = arith.constant 2 : index
    %c3_39 = arith.constant 3 : index
    %91 = memref.load %arg2[%c2_38, %c3_39] : memref<8x5xf32, #tpu.memory_space<smem>>
    %92 = vector.broadcast %91 : f32 to vector<2x16xf32>
    %93 = arith.mulf %92, %7 : vector<2x16xf32>
    %94 = arith.addf %86, %93 : vector<2x16xf32>
    %c3_40 = arith.constant 3 : index
    %c3_41 = arith.constant 3 : index
    %95 = memref.load %arg2[%c3_40, %c3_41] : memref<8x5xf32, #tpu.memory_space<smem>>
    %96 = vector.broadcast %95 : f32 to vector<2x16xf32>
    %97 = arith.mulf %96, %7 : vector<2x16xf32>
    %98 = arith.addf %90, %97 : vector<2x16xf32>
    %c2_42 = arith.constant 2 : index
    %c4_43 = arith.constant 4 : index
    %99 = memref.load %arg2[%c2_42, %c4_43] : memref<8x5xf32, #tpu.memory_space<smem>>
    %100 = vector.broadcast %99 : f32 to vector<2x16xf32>
    %101 = arith.mulf %100, %8 : vector<2x16xf32>
    %102 = arith.addf %94, %101 : vector<2x16xf32>
    %c3_44 = arith.constant 3 : index
    %c4_45 = arith.constant 4 : index
    %103 = memref.load %arg2[%c3_44, %c4_45] : memref<8x5xf32, #tpu.memory_space<smem>>
    %104 = vector.broadcast %103 : f32 to vector<2x16xf32>
    %105 = arith.mulf %104, %8 : vector<2x16xf32>
    %106 = arith.addf %98, %105 : vector<2x16xf32>
    %c2_46 = arith.constant 2 : index
    %107 = memref.load %arg3[%c2_46] : memref<8xf32, #tpu.memory_space<smem>>
    %108 = vector.broadcast %107 : f32 to vector<2x16xf32>
    %109 = arith.addf %102, %108 : vector<2x16xf32>
    %cst_47 = arith.constant 0.000000e+00 : f32
    %110 = vector.broadcast %cst_47 : f32 to vector<2x16xf32>
    %111 = arith.maximumf %109, %110 : vector<2x16xf32>
    %c3_48 = arith.constant 3 : index
    %112 = memref.load %arg3[%c3_48] : memref<8xf32, #tpu.memory_space<smem>>
    %113 = vector.broadcast %112 : f32 to vector<2x16xf32>
    %114 = arith.addf %106, %113 : vector<2x16xf32>
    %cst_49 = arith.constant 0.000000e+00 : f32
    %115 = vector.broadcast %cst_49 : f32 to vector<2x16xf32>
    %116 = arith.maximumf %114, %115 : vector<2x16xf32>
    %117 = arith.mulf %111, %111 : vector<2x16xf32>
    %118 = arith.mulf %116, %116 : vector<2x16xf32>
    %119 = arith.addf %117, %118 : vector<2x16xf32>
    %120 = math.sqrt %119 : vector<2x16xf32>
    %cst_50 = arith.constant 0.000000e+00 : f32
    %121 = vector.broadcast %cst_50 : f32 to vector<2x16xf32>
    %cst_51 = arith.constant 0.000000e+00 : f32
    %122 = vector.broadcast %cst_51 : f32 to vector<2x16xf32>
    %c4_52 = arith.constant 4 : index
    %c0_53 = arith.constant 0 : index
    %123 = memref.load %arg2[%c4_52, %c0_53] : memref<8x5xf32, #tpu.memory_space<smem>>
    %124 = vector.broadcast %123 : f32 to vector<2x16xf32>
    %125 = arith.mulf %124, %4 : vector<2x16xf32>
    %126 = arith.addf %121, %125 : vector<2x16xf32>
    %c5 = arith.constant 5 : index
    %c0_54 = arith.constant 0 : index
    %127 = memref.load %arg2[%c5, %c0_54] : memref<8x5xf32, #tpu.memory_space<smem>>
    %128 = vector.broadcast %127 : f32 to vector<2x16xf32>
    %129 = arith.mulf %128, %4 : vector<2x16xf32>
    %130 = arith.addf %122, %129 : vector<2x16xf32>
    %c4_55 = arith.constant 4 : index
    %c1_56 = arith.constant 1 : index
    %131 = memref.load %arg2[%c4_55, %c1_56] : memref<8x5xf32, #tpu.memory_space<smem>>
    %132 = vector.broadcast %131 : f32 to vector<2x16xf32>
    %133 = arith.mulf %132, %5 : vector<2x16xf32>
    %134 = arith.addf %126, %133 : vector<2x16xf32>
    %c5_57 = arith.constant 5 : index
    %c1_58 = arith.constant 1 : index
    %135 = memref.load %arg2[%c5_57, %c1_58] : memref<8x5xf32, #tpu.memory_space<smem>>
    %136 = vector.broadcast %135 : f32 to vector<2x16xf32>
    %137 = arith.mulf %136, %5 : vector<2x16xf32>
    %138 = arith.addf %130, %137 : vector<2x16xf32>
    %c4_59 = arith.constant 4 : index
    %c2_60 = arith.constant 2 : index
    %139 = memref.load %arg2[%c4_59, %c2_60] : memref<8x5xf32, #tpu.memory_space<smem>>
    %140 = vector.broadcast %139 : f32 to vector<2x16xf32>
    %141 = arith.mulf %140, %6 : vector<2x16xf32>
    %142 = arith.addf %134, %141 : vector<2x16xf32>
    %c5_61 = arith.constant 5 : index
    %c2_62 = arith.constant 2 : index
    %143 = memref.load %arg2[%c5_61, %c2_62] : memref<8x5xf32, #tpu.memory_space<smem>>
    %144 = vector.broadcast %143 : f32 to vector<2x16xf32>
    %145 = arith.mulf %144, %6 : vector<2x16xf32>
    %146 = arith.addf %138, %145 : vector<2x16xf32>
    %c4_63 = arith.constant 4 : index
    %c3_64 = arith.constant 3 : index
    %147 = memref.load %arg2[%c4_63, %c3_64] : memref<8x5xf32, #tpu.memory_space<smem>>
    %148 = vector.broadcast %147 : f32 to vector<2x16xf32>
    %149 = arith.mulf %148, %7 : vector<2x16xf32>
    %150 = arith.addf %142, %149 : vector<2x16xf32>
    %c5_65 = arith.constant 5 : index
    %c3_66 = arith.constant 3 : index
    %151 = memref.load %arg2[%c5_65, %c3_66] : memref<8x5xf32, #tpu.memory_space<smem>>
    %152 = vector.broadcast %151 : f32 to vector<2x16xf32>
    %153 = arith.mulf %152, %7 : vector<2x16xf32>
    %154 = arith.addf %146, %153 : vector<2x16xf32>
    %c4_67 = arith.constant 4 : index
    %c4_68 = arith.constant 4 : index
    %155 = memref.load %arg2[%c4_67, %c4_68] : memref<8x5xf32, #tpu.memory_space<smem>>
    %156 = vector.broadcast %155 : f32 to vector<2x16xf32>
    %157 = arith.mulf %156, %8 : vector<2x16xf32>
    %158 = arith.addf %150, %157 : vector<2x16xf32>
    %c5_69 = arith.constant 5 : index
    %c4_70 = arith.constant 4 : index
    %159 = memref.load %arg2[%c5_69, %c4_70] : memref<8x5xf32, #tpu.memory_space<smem>>
    %160 = vector.broadcast %159 : f32 to vector<2x16xf32>
    %161 = arith.mulf %160, %8 : vector<2x16xf32>
    %162 = arith.addf %154, %161 : vector<2x16xf32>
    %c4_71 = arith.constant 4 : index
    %163 = memref.load %arg3[%c4_71] : memref<8xf32, #tpu.memory_space<smem>>
    %164 = vector.broadcast %163 : f32 to vector<2x16xf32>
    %165 = arith.addf %158, %164 : vector<2x16xf32>
    %cst_72 = arith.constant 0.000000e+00 : f32
    %166 = vector.broadcast %cst_72 : f32 to vector<2x16xf32>
    %167 = arith.maximumf %165, %166 : vector<2x16xf32>
    %c5_73 = arith.constant 5 : index
    %168 = memref.load %arg3[%c5_73] : memref<8xf32, #tpu.memory_space<smem>>
    %169 = vector.broadcast %168 : f32 to vector<2x16xf32>
    %170 = arith.addf %162, %169 : vector<2x16xf32>
    %cst_74 = arith.constant 0.000000e+00 : f32
    %171 = vector.broadcast %cst_74 : f32 to vector<2x16xf32>
    %172 = arith.maximumf %170, %171 : vector<2x16xf32>
    %173 = arith.mulf %167, %167 : vector<2x16xf32>
    %174 = arith.mulf %172, %172 : vector<2x16xf32>
    %175 = arith.addf %173, %174 : vector<2x16xf32>
    %176 = math.sqrt %175 : vector<2x16xf32>
    %cst_75 = arith.constant 0.000000e+00 : f32
    %177 = vector.broadcast %cst_75 : f32 to vector<2x16xf32>
    %cst_76 = arith.constant 0.000000e+00 : f32
    %178 = vector.broadcast %cst_76 : f32 to vector<2x16xf32>
    %c6 = arith.constant 6 : index
    %c0_77 = arith.constant 0 : index
    %179 = memref.load %arg2[%c6, %c0_77] : memref<8x5xf32, #tpu.memory_space<smem>>
    %180 = vector.broadcast %179 : f32 to vector<2x16xf32>
    %181 = arith.mulf %180, %4 : vector<2x16xf32>
    %182 = arith.addf %177, %181 : vector<2x16xf32>
    %c7 = arith.constant 7 : index
    %c0_78 = arith.constant 0 : index
    %183 = memref.load %arg2[%c7, %c0_78] : memref<8x5xf32, #tpu.memory_space<smem>>
    %184 = vector.broadcast %183 : f32 to vector<2x16xf32>
    %185 = arith.mulf %184, %4 : vector<2x16xf32>
    %186 = arith.addf %178, %185 : vector<2x16xf32>
    %c6_79 = arith.constant 6 : index
    %c1_80 = arith.constant 1 : index
    %187 = memref.load %arg2[%c6_79, %c1_80] : memref<8x5xf32, #tpu.memory_space<smem>>
    %188 = vector.broadcast %187 : f32 to vector<2x16xf32>
    %189 = arith.mulf %188, %5 : vector<2x16xf32>
    %190 = arith.addf %182, %189 : vector<2x16xf32>
    %c7_81 = arith.constant 7 : index
    %c1_82 = arith.constant 1 : index
    %191 = memref.load %arg2[%c7_81, %c1_82] : memref<8x5xf32, #tpu.memory_space<smem>>
    %192 = vector.broadcast %191 : f32 to vector<2x16xf32>
    %193 = arith.mulf %192, %5 : vector<2x16xf32>
    %194 = arith.addf %186, %193 : vector<2x16xf32>
    %c6_83 = arith.constant 6 : index
    %c2_84 = arith.constant 2 : index
    %195 = memref.load %arg2[%c6_83, %c2_84] : memref<8x5xf32, #tpu.memory_space<smem>>
    %196 = vector.broadcast %195 : f32 to vector<2x16xf32>
    %197 = arith.mulf %196, %6 : vector<2x16xf32>
    %198 = arith.addf %190, %197 : vector<2x16xf32>
    %c7_85 = arith.constant 7 : index
    %c2_86 = arith.constant 2 : index
    %199 = memref.load %arg2[%c7_85, %c2_86] : memref<8x5xf32, #tpu.memory_space<smem>>
    %200 = vector.broadcast %199 : f32 to vector<2x16xf32>
    %201 = arith.mulf %200, %6 : vector<2x16xf32>
    %202 = arith.addf %194, %201 : vector<2x16xf32>
    %c6_87 = arith.constant 6 : index
    %c3_88 = arith.constant 3 : index
    %203 = memref.load %arg2[%c6_87, %c3_88] : memref<8x5xf32, #tpu.memory_space<smem>>
    %204 = vector.broadcast %203 : f32 to vector<2x16xf32>
    %205 = arith.mulf %204, %7 : vector<2x16xf32>
    %206 = arith.addf %198, %205 : vector<2x16xf32>
    %c7_89 = arith.constant 7 : index
    %c3_90 = arith.constant 3 : index
    %207 = memref.load %arg2[%c7_89, %c3_90] : memref<8x5xf32, #tpu.memory_space<smem>>
    %208 = vector.broadcast %207 : f32 to vector<2x16xf32>
    %209 = arith.mulf %208, %7 : vector<2x16xf32>
    %210 = arith.addf %202, %209 : vector<2x16xf32>
    %c6_91 = arith.constant 6 : index
    %c4_92 = arith.constant 4 : index
    %211 = memref.load %arg2[%c6_91, %c4_92] : memref<8x5xf32, #tpu.memory_space<smem>>
    %212 = vector.broadcast %211 : f32 to vector<2x16xf32>
    %213 = arith.mulf %212, %8 : vector<2x16xf32>
    %214 = arith.addf %206, %213 : vector<2x16xf32>
    %c7_93 = arith.constant 7 : index
    %c4_94 = arith.constant 4 : index
    %215 = memref.load %arg2[%c7_93, %c4_94] : memref<8x5xf32, #tpu.memory_space<smem>>
    %216 = vector.broadcast %215 : f32 to vector<2x16xf32>
    %217 = arith.mulf %216, %8 : vector<2x16xf32>
    %218 = arith.addf %210, %217 : vector<2x16xf32>
    %c6_95 = arith.constant 6 : index
    %219 = memref.load %arg3[%c6_95] : memref<8xf32, #tpu.memory_space<smem>>
    %220 = vector.broadcast %219 : f32 to vector<2x16xf32>
    %221 = arith.addf %214, %220 : vector<2x16xf32>
    %cst_96 = arith.constant 0.000000e+00 : f32
    %222 = vector.broadcast %cst_96 : f32 to vector<2x16xf32>
    %223 = arith.maximumf %221, %222 : vector<2x16xf32>
    %c7_97 = arith.constant 7 : index
    %224 = memref.load %arg3[%c7_97] : memref<8xf32, #tpu.memory_space<smem>>
    %225 = vector.broadcast %224 : f32 to vector<2x16xf32>
    %226 = arith.addf %218, %225 : vector<2x16xf32>
    %cst_98 = arith.constant 0.000000e+00 : f32
    %227 = vector.broadcast %cst_98 : f32 to vector<2x16xf32>
    %228 = arith.maximumf %226, %227 : vector<2x16xf32>
    %229 = arith.mulf %223, %223 : vector<2x16xf32>
    %230 = arith.mulf %228, %228 : vector<2x16xf32>
    %231 = arith.addf %229, %230 : vector<2x16xf32>
    %232 = math.sqrt %231 : vector<2x16xf32>
    %233 = tpu.concatenate %64, %120, %176, %232 in 0 : vector<2x16xf32>, vector<2x16xf32>, vector<2x16xf32>, vector<2x16xf32> -> vector<8x16xf32>
    %cst_99 = arith.constant dense<0.000000e+00> : vector<8xf32>
    %234 = vector.multi_reduction <add>, %233, %cst_99 [1] : vector<8x16xf32> to vector<8xf32>
    %235 = vector.shape_cast %234 : vector<8xf32> to vector<8x1xf32>
    %cst_100 = arith.constant 1.600000e+01 : f32
    %236 = vector.broadcast %cst_100 : f32 to vector<8x1xf32>
    %237 = arith.divf %235, %236 : vector<8x1xf32>
    %238 = vector.broadcast %237 : vector<8x1xf32> to vector<8x16xf32>
    %239 = arith.subf %233, %238 : vector<8x16xf32>
    %240 = arith.mulf %239, %239 : vector<8x16xf32>
    %cst_101 = arith.constant dense<0.000000e+00> : vector<8xf32>
    %241 = vector.multi_reduction <add>, %240, %cst_101 [1] : vector<8x16xf32> to vector<8xf32>
    %242 = vector.shape_cast %241 : vector<8xf32> to vector<8x1xf32>
    %cst_102 = arith.constant 1.600000e+01 : f32
    %243 = vector.broadcast %cst_102 : f32 to vector<8x1xf32>
    %244 = arith.divf %242, %243 : vector<8x1xf32>
    %245 = vector.broadcast %237 : vector<8x1xf32> to vector<8x16xf32>
    %246 = arith.subf %233, %245 : vector<8x16xf32>
    %cst_103 = arith.constant 9.99999974E-6 : f32
    %247 = vector.broadcast %cst_103 : f32 to vector<8x1xf32>
    %248 = arith.addf %244, %247 : vector<8x1xf32>
    %249 = math.rsqrt %248 : vector<8x1xf32>
    %250 = vector.broadcast %249 : vector<8x1xf32> to vector<8x16xf32>
    %251 = arith.mulf %246, %250 : vector<8x16xf32>
    %c0_104 = arith.constant 0 : index
    %c0_105 = arith.constant 0 : index
    %c0_106 = arith.constant 0 : index
    %252 = vector.load %arg6[%c0_104, %c0_105, %c0_106] : memref<2x1x16xf32, #tpu.memory_space<vmem>>, vector<1x1x16xf32>
    %253 = vector.shape_cast %252 : vector<1x1x16xf32> to vector<1x16xf32>
    %254 = vector.broadcast %253 : vector<1x16xf32> to vector<8x16xf32>
    %255 = arith.mulf %251, %254 : vector<8x16xf32>
    %c0_107 = arith.constant 0 : index
    %c0_108 = arith.constant 0 : index
    %c0_109 = arith.constant 0 : index
    %256 = vector.load %arg7[%c0_107, %c0_108, %c0_109] : memref<2x1x16xf32, #tpu.memory_space<vmem>>, vector<1x1x16xf32>
    %257 = vector.shape_cast %256 : vector<1x1x16xf32> to vector<1x16xf32>
    %258 = vector.broadcast %257 : vector<1x16xf32> to vector<8x16xf32>
    %259 = arith.addf %255, %258 : vector<8x16xf32>
    %260 = arith.truncf %259 : vector<8x16xf32> to vector<8x16xbf16>
    %c0_110 = arith.constant 0 : index
    %c0_111 = arith.constant 0 : index
    %c0_112 = arith.constant 0 : index
    %261 = vector.load %arg4[%c0_110, %c0_111, %c0_112] : memref<2x16x16xbf16, #tpu.memory_space<vmem>>, vector<1x16x16xbf16>
    %262 = vector.shape_cast %261 : vector<1x16x16xbf16> to vector<16x16xbf16>
    %cst_113 = arith.constant dense<0.000000e+00> : vector<8x16xf32>
    %263 = tpu.matmul %260, %262, %cst_113 {dimension_numbers = #tpu.dot_dimension_numbers<[1], [0], [0], [1], [0, 0, 1, 1], [], []>} : vector<8x16xbf16>, vector<16x16xbf16>, vector<8x16xf32> -> vector<8x16xf32>
    %c0_114 = arith.constant 0 : index
    %c0_115 = arith.constant 0 : index
    %c0_116 = arith.constant 0 : index
    %264 = vector.load %arg5[%c0_114, %c0_115, %c0_116] : memref<2x1x16xf32, #tpu.memory_space<vmem>>, vector<1x1x16xf32>
    %265 = vector.shape_cast %264 : vector<1x1x16xf32> to vector<1x16xf32>
    %266 = vector.broadcast %265 : vector<1x16xf32> to vector<8x16xf32>
    %267 = arith.addf %263, %266 : vector<8x16xf32>
    %268 = arith.addf %233, %267 : vector<8x16xf32>
    %cst_117 = arith.constant dense<0.000000e+00> : vector<8xf32>
    %269 = vector.multi_reduction <add>, %268, %cst_117 [1] : vector<8x16xf32> to vector<8xf32>
    %270 = vector.shape_cast %269 : vector<8xf32> to vector<8x1xf32>
    %cst_118 = arith.constant 1.600000e+01 : f32
    %271 = vector.broadcast %cst_118 : f32 to vector<8x1xf32>
    %272 = arith.divf %270, %271 : vector<8x1xf32>
    %273 = vector.broadcast %272 : vector<8x1xf32> to vector<8x16xf32>
    %274 = arith.subf %268, %273 : vector<8x16xf32>
    %275 = arith.mulf %274, %274 : vector<8x16xf32>
    %cst_119 = arith.constant dense<0.000000e+00> : vector<8xf32>
    %276 = vector.multi_reduction <add>, %275, %cst_119 [1] : vector<8x16xf32> to vector<8xf32>
    %277 = vector.shape_cast %276 : vector<8xf32> to vector<8x1xf32>
    %cst_120 = arith.constant 1.600000e+01 : f32
    %278 = vector.broadcast %cst_120 : f32 to vector<8x1xf32>
    %279 = arith.divf %277, %278 : vector<8x1xf32>
    %280 = vector.broadcast %272 : vector<8x1xf32> to vector<8x16xf32>
    %281 = arith.subf %268, %280 : vector<8x16xf32>
    %cst_121 = arith.constant 9.99999974E-6 : f32
    %282 = vector.broadcast %cst_121 : f32 to vector<8x1xf32>
    %283 = arith.addf %279, %282 : vector<8x1xf32>
    %284 = math.rsqrt %283 : vector<8x1xf32>
    %285 = vector.broadcast %284 : vector<8x1xf32> to vector<8x16xf32>
    %286 = arith.mulf %281, %285 : vector<8x16xf32>
    %c0_122 = arith.constant 0 : index
    %c0_123 = arith.constant 0 : index
    %c0_124 = arith.constant 0 : index
    %287 = vector.load %arg8[%c0_122, %c0_123, %c0_124] : memref<2x1x16xf32, #tpu.memory_space<vmem>>, vector<1x1x16xf32>
    %288 = vector.shape_cast %287 : vector<1x1x16xf32> to vector<1x16xf32>
    %289 = vector.broadcast %288 : vector<1x16xf32> to vector<8x16xf32>
    %290 = arith.mulf %286, %289 : vector<8x16xf32>
    %c0_125 = arith.constant 0 : index
    %c0_126 = arith.constant 0 : index
    %c0_127 = arith.constant 0 : index
    %291 = vector.load %arg9[%c0_125, %c0_126, %c0_127] : memref<2x1x16xf32, #tpu.memory_space<vmem>>, vector<1x1x16xf32>
    %292 = vector.shape_cast %291 : vector<1x1x16xf32> to vector<1x16xf32>
    %293 = vector.broadcast %292 : vector<1x16xf32> to vector<8x16xf32>
    %294 = arith.addf %290, %293 : vector<8x16xf32>
    %295 = arith.truncf %294 : vector<8x16xf32> to vector<8x16xbf16>
    %c0_128 = arith.constant 0 : index
    %c0_129 = arith.constant 0 : index
    %c0_130 = arith.constant 0 : index
    %296 = vector.load %arg10[%c0_128, %c0_129, %c0_130] : memref<2x16x32xbf16, #tpu.memory_space<vmem>>, vector<1x16x32xbf16>
    %297 = vector.shape_cast %296 : vector<1x16x32xbf16> to vector<16x32xbf16>
    %cst_131 = arith.constant dense<0.000000e+00> : vector<8x32xf32>
    %298 = tpu.matmul %295, %297, %cst_131 {dimension_numbers = #tpu.dot_dimension_numbers<[1], [0], [0], [1], [0, 0, 1, 1], [], []>} : vector<8x16xbf16>, vector<16x32xbf16>, vector<8x32xf32> -> vector<8x32xf32>
    %c0_132 = arith.constant 0 : index
    %c0_133 = arith.constant 0 : index
    %c0_134 = arith.constant 0 : index
    %299 = vector.load %arg11[%c0_132, %c0_133, %c0_134] : memref<2x1x32xf32, #tpu.memory_space<vmem>>, vector<1x1x32xf32>
    %300 = vector.shape_cast %299 : vector<1x1x32xf32> to vector<1x32xf32>
    %301 = vector.broadcast %300 : vector<1x32xf32> to vector<8x32xf32>
    %302 = arith.addf %298, %301 : vector<8x32xf32>
    %cst_135 = arith.constant 0.000000e+00 : f32
    %303 = vector.broadcast %cst_135 : f32 to vector<8x32xf32>
    %304 = arith.maximumf %302, %303 : vector<8x32xf32>
    %305 = arith.truncf %304 : vector<8x32xf32> to vector<8x32xbf16>
    %c0_136 = arith.constant 0 : index
    %c0_137 = arith.constant 0 : index
    %c0_138 = arith.constant 0 : index
    %306 = vector.load %arg12[%c0_136, %c0_137, %c0_138] : memref<2x32x16xbf16, #tpu.memory_space<vmem>>, vector<1x32x16xbf16>
    %307 = vector.shape_cast %306 : vector<1x32x16xbf16> to vector<32x16xbf16>
    %cst_139 = arith.constant dense<0.000000e+00> : vector<8x16xf32>
    %308 = tpu.matmul %305, %307, %cst_139 {dimension_numbers = #tpu.dot_dimension_numbers<[1], [0], [0], [1], [0, 0, 1, 1], [], []>} : vector<8x32xbf16>, vector<32x16xbf16>, vector<8x16xf32> -> vector<8x16xf32>
    %309 = arith.addf %294, %308 : vector<8x16xf32>
    %c0_140 = arith.constant 0 : index
    %c0_141 = arith.constant 0 : index
    %c0_142 = arith.constant 0 : index
    %310 = vector.load %arg13[%c0_140, %c0_141, %c0_142] : memref<2x1x16xf32, #tpu.memory_space<vmem>>, vector<1x1x16xf32>
    %311 = vector.shape_cast %310 : vector<1x1x16xf32> to vector<1x16xf32>
    %312 = vector.broadcast %311 : vector<1x16xf32> to vector<8x16xf32>
    %313 = arith.addf %309, %312 : vector<8x16xf32>
    %cst_143 = arith.constant dense<0.000000e+00> : vector<8xf32>
    %314 = vector.multi_reduction <add>, %313, %cst_143 [1] : vector<8x16xf32> to vector<8xf32>
    %315 = vector.shape_cast %314 : vector<8xf32> to vector<8x1xf32>
    %cst_144 = arith.constant 1.600000e+01 : f32
    %316 = vector.broadcast %cst_144 : f32 to vector<8x1xf32>
    %317 = arith.divf %315, %316 : vector<8x1xf32>
    %318 = vector.broadcast %317 : vector<8x1xf32> to vector<8x16xf32>
    %319 = arith.subf %313, %318 : vector<8x16xf32>
    %320 = arith.mulf %319, %319 : vector<8x16xf32>
    %cst_145 = arith.constant dense<0.000000e+00> : vector<8xf32>
    %321 = vector.multi_reduction <add>, %320, %cst_145 [1] : vector<8x16xf32> to vector<8xf32>
    %322 = vector.shape_cast %321 : vector<8xf32> to vector<8x1xf32>
    %cst_146 = arith.constant 1.600000e+01 : f32
    %323 = vector.broadcast %cst_146 : f32 to vector<8x1xf32>
    %324 = arith.divf %322, %323 : vector<8x1xf32>
    %325 = vector.broadcast %317 : vector<8x1xf32> to vector<8x16xf32>
    %326 = arith.subf %313, %325 : vector<8x16xf32>
    %cst_147 = arith.constant 9.99999974E-6 : f32
    %327 = vector.broadcast %cst_147 : f32 to vector<8x1xf32>
    %328 = arith.addf %324, %327 : vector<8x1xf32>
    %329 = math.rsqrt %328 : vector<8x1xf32>
    %330 = vector.broadcast %329 : vector<8x1xf32> to vector<8x16xf32>
    %331 = arith.mulf %326, %330 : vector<8x16xf32>
    %c1_148 = arith.constant 1 : index
    %c0_149 = arith.constant 0 : index
    %c0_150 = arith.constant 0 : index
    %332 = vector.load %arg6[%c1_148, %c0_149, %c0_150] : memref<2x1x16xf32, #tpu.memory_space<vmem>>, vector<1x1x16xf32>
    %333 = vector.shape_cast %332 : vector<1x1x16xf32> to vector<1x16xf32>
    %334 = vector.broadcast %333 : vector<1x16xf32> to vector<8x16xf32>
    %335 = arith.mulf %331, %334 : vector<8x16xf32>
    %c1_151 = arith.constant 1 : index
    %c0_152 = arith.constant 0 : index
    %c0_153 = arith.constant 0 : index
    %336 = vector.load %arg7[%c1_151, %c0_152, %c0_153] : memref<2x1x16xf32, #tpu.memory_space<vmem>>, vector<1x1x16xf32>
    %337 = vector.shape_cast %336 : vector<1x1x16xf32> to vector<1x16xf32>
    %338 = vector.broadcast %337 : vector<1x16xf32> to vector<8x16xf32>
    %339 = arith.addf %335, %338 : vector<8x16xf32>
    %340 = arith.truncf %339 : vector<8x16xf32> to vector<8x16xbf16>
    %c1_154 = arith.constant 1 : index
    %c0_155 = arith.constant 0 : index
    %c0_156 = arith.constant 0 : index
    %341 = vector.load %arg4[%c1_154, %c0_155, %c0_156] : memref<2x16x16xbf16, #tpu.memory_space<vmem>>, vector<1x16x16xbf16>
    %342 = vector.shape_cast %341 : vector<1x16x16xbf16> to vector<16x16xbf16>
    %cst_157 = arith.constant dense<0.000000e+00> : vector<8x16xf32>
    %343 = tpu.matmul %340, %342, %cst_157 {dimension_numbers = #tpu.dot_dimension_numbers<[1], [0], [0], [1], [0, 0, 1, 1], [], []>} : vector<8x16xbf16>, vector<16x16xbf16>, vector<8x16xf32> -> vector<8x16xf32>
    %c1_158 = arith.constant 1 : index
    %c0_159 = arith.constant 0 : index
    %c0_160 = arith.constant 0 : index
    %344 = vector.load %arg5[%c1_158, %c0_159, %c0_160] : memref<2x1x16xf32, #tpu.memory_space<vmem>>, vector<1x1x16xf32>
    %345 = vector.shape_cast %344 : vector<1x1x16xf32> to vector<1x16xf32>
    %346 = vector.broadcast %345 : vector<1x16xf32> to vector<8x16xf32>
    %347 = arith.addf %343, %346 : vector<8x16xf32>
    %348 = arith.addf %313, %347 : vector<8x16xf32>
    %cst_161 = arith.constant dense<0.000000e+00> : vector<8xf32>
    %349 = vector.multi_reduction <add>, %348, %cst_161 [1] : vector<8x16xf32> to vector<8xf32>
    %350 = vector.shape_cast %349 : vector<8xf32> to vector<8x1xf32>
    %cst_162 = arith.constant 1.600000e+01 : f32
    %351 = vector.broadcast %cst_162 : f32 to vector<8x1xf32>
    %352 = arith.divf %350, %351 : vector<8x1xf32>
    %353 = vector.broadcast %352 : vector<8x1xf32> to vector<8x16xf32>
    %354 = arith.subf %348, %353 : vector<8x16xf32>
    %355 = arith.mulf %354, %354 : vector<8x16xf32>
    %cst_163 = arith.constant dense<0.000000e+00> : vector<8xf32>
    %356 = vector.multi_reduction <add>, %355, %cst_163 [1] : vector<8x16xf32> to vector<8xf32>
    %357 = vector.shape_cast %356 : vector<8xf32> to vector<8x1xf32>
    %cst_164 = arith.constant 1.600000e+01 : f32
    %358 = vector.broadcast %cst_164 : f32 to vector<8x1xf32>
    %359 = arith.divf %357, %358 : vector<8x1xf32>
    %360 = vector.broadcast %352 : vector<8x1xf32> to vector<8x16xf32>
    %361 = arith.subf %348, %360 : vector<8x16xf32>
    %cst_165 = arith.constant 9.99999974E-6 : f32
    %362 = vector.broadcast %cst_165 : f32 to vector<8x1xf32>
    %363 = arith.addf %359, %362 : vector<8x1xf32>
    %364 = math.rsqrt %363 : vector<8x1xf32>
    %365 = vector.broadcast %364 : vector<8x1xf32> to vector<8x16xf32>
    %366 = arith.mulf %361, %365 : vector<8x16xf32>
    %c1_166 = arith.constant 1 : index
    %c0_167 = arith.constant 0 : index
    %c0_168 = arith.constant 0 : index
    %367 = vector.load %arg8[%c1_166, %c0_167, %c0_168] : memref<2x1x16xf32, #tpu.memory_space<vmem>>, vector<1x1x16xf32>
    %368 = vector.shape_cast %367 : vector<1x1x16xf32> to vector<1x16xf32>
    %369 = vector.broadcast %368 : vector<1x16xf32> to vector<8x16xf32>
    %370 = arith.mulf %366, %369 : vector<8x16xf32>
    %c1_169 = arith.constant 1 : index
    %c0_170 = arith.constant 0 : index
    %c0_171 = arith.constant 0 : index
    %371 = vector.load %arg9[%c1_169, %c0_170, %c0_171] : memref<2x1x16xf32, #tpu.memory_space<vmem>>, vector<1x1x16xf32>
    %372 = vector.shape_cast %371 : vector<1x1x16xf32> to vector<1x16xf32>
    %373 = vector.broadcast %372 : vector<1x16xf32> to vector<8x16xf32>
    %374 = arith.addf %370, %373 : vector<8x16xf32>
    %375 = arith.truncf %374 : vector<8x16xf32> to vector<8x16xbf16>
    %c1_172 = arith.constant 1 : index
    %c0_173 = arith.constant 0 : index
    %c0_174 = arith.constant 0 : index
    %376 = vector.load %arg10[%c1_172, %c0_173, %c0_174] : memref<2x16x32xbf16, #tpu.memory_space<vmem>>, vector<1x16x32xbf16>
    %377 = vector.shape_cast %376 : vector<1x16x32xbf16> to vector<16x32xbf16>
    %cst_175 = arith.constant dense<0.000000e+00> : vector<8x32xf32>
    %378 = tpu.matmul %375, %377, %cst_175 {dimension_numbers = #tpu.dot_dimension_numbers<[1], [0], [0], [1], [0, 0, 1, 1], [], []>} : vector<8x16xbf16>, vector<16x32xbf16>, vector<8x32xf32> -> vector<8x32xf32>
    %c1_176 = arith.constant 1 : index
    %c0_177 = arith.constant 0 : index
    %c0_178 = arith.constant 0 : index
    %379 = vector.load %arg11[%c1_176, %c0_177, %c0_178] : memref<2x1x32xf32, #tpu.memory_space<vmem>>, vector<1x1x32xf32>
    %380 = vector.shape_cast %379 : vector<1x1x32xf32> to vector<1x32xf32>
    %381 = vector.broadcast %380 : vector<1x32xf32> to vector<8x32xf32>
    %382 = arith.addf %378, %381 : vector<8x32xf32>
    %cst_179 = arith.constant 0.000000e+00 : f32
    %383 = vector.broadcast %cst_179 : f32 to vector<8x32xf32>
    %384 = arith.maximumf %382, %383 : vector<8x32xf32>
    %385 = arith.truncf %384 : vector<8x32xf32> to vector<8x32xbf16>
    %c1_180 = arith.constant 1 : index
    %c0_181 = arith.constant 0 : index
    %c0_182 = arith.constant 0 : index
    %386 = vector.load %arg12[%c1_180, %c0_181, %c0_182] : memref<2x32x16xbf16, #tpu.memory_space<vmem>>, vector<1x32x16xbf16>
    %387 = vector.shape_cast %386 : vector<1x32x16xbf16> to vector<32x16xbf16>
    %cst_183 = arith.constant dense<0.000000e+00> : vector<8x16xf32>
    %388 = tpu.matmul %385, %387, %cst_183 {dimension_numbers = #tpu.dot_dimension_numbers<[1], [0], [0], [1], [0, 0, 1, 1], [], []>} : vector<8x32xbf16>, vector<32x16xbf16>, vector<8x16xf32> -> vector<8x16xf32>
    %389 = arith.addf %374, %388 : vector<8x16xf32>
    %c1_184 = arith.constant 1 : index
    %c0_185 = arith.constant 0 : index
    %c0_186 = arith.constant 0 : index
    %390 = vector.load %arg13[%c1_184, %c0_185, %c0_186] : memref<2x1x16xf32, #tpu.memory_space<vmem>>, vector<1x1x16xf32>
    %391 = vector.shape_cast %390 : vector<1x1x16xf32> to vector<1x16xf32>
    %392 = vector.broadcast %391 : vector<1x16xf32> to vector<8x16xf32>
    %393 = arith.addf %389, %392 : vector<8x16xf32>
    %cst_187 = arith.constant 0.000000e+00 : f32
    %394 = vector.broadcast %cst_187 : f32 to vector<2x8xf32>
    %395 = vector.extract_strided_slice %393 {offsets = [0, 0], sizes = [2, 16], strides = [1, 1]} : vector<8x16xf32> to vector<2x16xf32>
    %396 = arith.truncf %395 : vector<2x16xf32> to vector<2x16xbf16>
    %c0_188 = arith.constant 0 : index
    %c0_189 = arith.constant 0 : index
    %c0_190 = arith.constant 0 : index
    %397 = vector.load %arg14[%c0_188, %c0_189, %c0_190] : memref<4x16x8xbf16, #tpu.memory_space<vmem>>, vector<1x16x8xbf16>
    %398 = vector.shape_cast %397 : vector<1x16x8xbf16> to vector<16x8xbf16>
    %cst_191 = arith.constant dense<0.000000e+00> : vector<2x8xf32>
    %399 = tpu.matmul %396, %398, %cst_191 {dimension_numbers = #tpu.dot_dimension_numbers<[1], [0], [0], [1], [0, 0, 1, 1], [], []>} : vector<2x16xbf16>, vector<16x8xbf16>, vector<2x8xf32> -> vector<2x8xf32>
    %400 = arith.addf %394, %399 : vector<2x8xf32>
    %401 = vector.extract_strided_slice %393 {offsets = [2, 0], sizes = [2, 16], strides = [1, 1]} : vector<8x16xf32> to vector<2x16xf32>
    %402 = arith.truncf %401 : vector<2x16xf32> to vector<2x16xbf16>
    %c1_192 = arith.constant 1 : index
    %c0_193 = arith.constant 0 : index
    %c0_194 = arith.constant 0 : index
    %403 = vector.load %arg14[%c1_192, %c0_193, %c0_194] : memref<4x16x8xbf16, #tpu.memory_space<vmem>>, vector<1x16x8xbf16>
    %404 = vector.shape_cast %403 : vector<1x16x8xbf16> to vector<16x8xbf16>
    %cst_195 = arith.constant dense<0.000000e+00> : vector<2x8xf32>
    %405 = tpu.matmul %402, %404, %cst_195 {dimension_numbers = #tpu.dot_dimension_numbers<[1], [0], [0], [1], [0, 0, 1, 1], [], []>} : vector<2x16xbf16>, vector<16x8xbf16>, vector<2x8xf32> -> vector<2x8xf32>
    %406 = arith.addf %400, %405 : vector<2x8xf32>
    %407 = vector.extract_strided_slice %393 {offsets = [4, 0], sizes = [2, 16], strides = [1, 1]} : vector<8x16xf32> to vector<2x16xf32>
    %408 = arith.truncf %407 : vector<2x16xf32> to vector<2x16xbf16>
    %c2_196 = arith.constant 2 : index
    %c0_197 = arith.constant 0 : index
    %c0_198 = arith.constant 0 : index
    %409 = vector.load %arg14[%c2_196, %c0_197, %c0_198] : memref<4x16x8xbf16, #tpu.memory_space<vmem>>, vector<1x16x8xbf16>
    %410 = vector.shape_cast %409 : vector<1x16x8xbf16> to vector<16x8xbf16>
    %cst_199 = arith.constant dense<0.000000e+00> : vector<2x8xf32>
    %411 = tpu.matmul %408, %410, %cst_199 {dimension_numbers = #tpu.dot_dimension_numbers<[1], [0], [0], [1], [0, 0, 1, 1], [], []>} : vector<2x16xbf16>, vector<16x8xbf16>, vector<2x8xf32> -> vector<2x8xf32>
    %412 = arith.addf %406, %411 : vector<2x8xf32>
    %413 = vector.extract_strided_slice %393 {offsets = [6, 0], sizes = [2, 16], strides = [1, 1]} : vector<8x16xf32> to vector<2x16xf32>
    %414 = arith.truncf %413 : vector<2x16xf32> to vector<2x16xbf16>
    %c3_200 = arith.constant 3 : index
    %c0_201 = arith.constant 0 : index
    %c0_202 = arith.constant 0 : index
    %415 = vector.load %arg14[%c3_200, %c0_201, %c0_202] : memref<4x16x8xbf16, #tpu.memory_space<vmem>>, vector<1x16x8xbf16>
    %416 = vector.shape_cast %415 : vector<1x16x8xbf16> to vector<16x8xbf16>
    %cst_203 = arith.constant dense<0.000000e+00> : vector<2x8xf32>
    %417 = tpu.matmul %414, %416, %cst_203 {dimension_numbers = #tpu.dot_dimension_numbers<[1], [0], [0], [1], [0, 0, 1, 1], [], []>} : vector<2x16xbf16>, vector<16x8xbf16>, vector<2x8xf32> -> vector<2x8xf32>
    %418 = arith.addf %412, %417 : vector<2x8xf32>
    %c0_204 = arith.constant 0 : index
    %c0_205 = arith.constant 0 : index
    %419 = vector.load %arg15[%c0_204, %c0_205] : memref<1x8xf32, #tpu.memory_space<vmem>>, vector<1x8xf32>
    %420 = vector.broadcast %419 : vector<1x8xf32> to vector<2x8xf32>
    %421 = arith.addf %418, %420 : vector<2x8xf32>
    %cst_206 = arith.constant 0.000000e+00 : f32
    %422 = vector.broadcast %cst_206 : f32 to vector<2x8xf32>
    %423 = arith.maximumf %421, %422 : vector<2x8xf32>
    %424 = arith.truncf %423 : vector<2x8xf32> to vector<2x8xbf16>
    %c0_207 = arith.constant 0 : index
    %c0_208 = arith.constant 0 : index
    %425 = vector.load %arg16[%c0_207, %c0_208] : memref<8x4xbf16, #tpu.memory_space<vmem>>, vector<8x4xbf16>
    %cst_209 = arith.constant dense<0.000000e+00> : vector<2x4xf32>
    %426 = tpu.matmul %424, %425, %cst_209 {dimension_numbers = #tpu.dot_dimension_numbers<[1], [0], [0], [1], [0, 0, 1, 1], [], []>} : vector<2x8xbf16>, vector<8x4xbf16>, vector<2x4xf32> -> vector<2x4xf32>
    %c0_210 = arith.constant 0 : index
    %c0_211 = arith.constant 0 : index
    %427 = vector.load %arg17[%c0_210, %c0_211] : memref<1x4xf32, #tpu.memory_space<vmem>>, vector<1x4xf32>
    %428 = vector.broadcast %427 : vector<1x4xf32> to vector<2x4xf32>
    %429 = arith.addf %426, %428 : vector<2x4xf32>
    %cst_212 = arith.constant 0.000000e+00 : f32
    %430 = vector.broadcast %cst_212 : f32 to vector<2x4xf32>
    %431 = arith.maximumf %429, %430 : vector<2x4xf32>
    %432 = arith.truncf %431 : vector<2x4xf32> to vector<2x4xbf16>
    %c0_213 = arith.constant 0 : index
    %c0_214 = arith.constant 0 : index
    %433 = vector.load %arg18[%c0_213, %c0_214] : memref<4x1xbf16, #tpu.memory_space<vmem>>, vector<4x1xbf16>
    %cst_215 = arith.constant dense<0.000000e+00> : vector<2x1xf32>
    %434 = tpu.matmul %432, %433, %cst_215 {dimension_numbers = #tpu.dot_dimension_numbers<[1], [0], [0], [1], [0, 0, 1, 1], [], []>} : vector<2x4xbf16>, vector<4x1xbf16>, vector<2x1xf32> -> vector<2x1xf32>
    %c0_216 = arith.constant 0 : index
    %c0_217 = arith.constant 0 : index
    %435 = vector.load %arg19[%c0_216, %c0_217] : memref<1x1xf32, #tpu.memory_space<vmem>>, vector<1x1xf32>
    %436 = vector.broadcast %435 : vector<1x1xf32> to vector<2x1xf32>
    %437 = arith.addf %434, %436 : vector<2x1xf32>
    %c0_218 = arith.constant 0 : index
    %c0_219 = arith.constant 0 : index
    %438 = vector.load %arg20[%c0_218, %c0_219] : memref<2x1xf32, #tpu.memory_space<vmem>>, vector<2x1xf32>
    tpu.vector_store %arg20[%c0_218, %c0_219], %437 {strides = array<i32>} : memref<2x1xf32, #tpu.memory_space<vmem>>, vector<2x1xf32>,
    return
  }
  func.func @transform_0(%arg0: i32) -> (i32, i32) {
    %c0_i32 = arith.constant 0 : i32
    %c0_i32_0 = arith.constant 0 : i32
    return %arg0, %c0_i32 : i32, i32
  }
  func.func @transform_1(%arg0: i32) -> (i32, i32) {
    %c0_i32 = arith.constant 0 : i32
    %c0_i32_0 = arith.constant 0 : i32
    %c0_i32_1 = arith.constant 0 : i32
    return %c0_i32, %c0_i32_0 : i32, i32
  }
  func.func @transform_2(%arg0: i32) -> i32 {
    %c0_i32 = arith.constant 0 : i32
    %c0_i32_0 = arith.constant 0 : i32
    return %c0_i32 : i32
  }
  func.func @transform_3(%arg0: i32) -> (i32, i32, i32) {
    %c0_i32 = arith.constant 0 : i32
    %c0_i32_0 = arith.constant 0 : i32
    %c0_i32_1 = arith.constant 0 : i32
    %c0_i32_2 = arith.constant 0 : i32
    return %c0_i32, %c0_i32_0, %c0_i32_1 : i32, i32, i32
  }
  func.func @transform_4(%arg0: i32) -> (i32, i32, i32) {
    %c0_i32 = arith.constant 0 : i32
    %c0_i32_0 = arith.constant 0 : i32
    %c0_i32_1 = arith.constant 0 : i32
    %c0_i32_2 = arith.constant 0 : i32
    return %c0_i32, %c0_i32_0, %c0_i32_1 : i32, i32, i32
  }
  func.func @transform_5(%arg0: i32) -> (i32, i32, i32) {
    %c0_i32 = arith.constant 0 : i32
    %c0_i32_0 = arith.constant 0 : i32
    %c0_i32_1 = arith.constant 0 : i32
    %c0_i32_2 = arith.constant 0 : i32
    return %c0_i32, %c0_i32_0, %c0_i32_1 : i32, i32, i32
  }
  func.func @transform_6(%arg0: i32) -> (i32, i32, i32) {
    %c0_i32 = arith.constant 0 : i32
    %c0_i32_0 = arith.constant 0 : i32
    %c0_i32_1 = arith.constant 0 : i32
    %c0_i32_2 = arith.constant 0 : i32
    return %c0_i32, %c0_i32_0, %c0_i32_1 : i32, i32, i32
  }
  func.func @transform_7(%arg0: i32) -> (i32, i32, i32) {
    %c0_i32 = arith.constant 0 : i32
    %c0_i32_0 = arith.constant 0 : i32
    %c0_i32_1 = arith.constant 0 : i32
    %c0_i32_2 = arith.constant 0 : i32
    return %c0_i32, %c0_i32_0, %c0_i32_1 : i32, i32, i32
  }
  func.func @transform_8(%arg0: i32) -> (i32, i32, i32) {
    %c0_i32 = arith.constant 0 : i32
    %c0_i32_0 = arith.constant 0 : i32
    %c0_i32_1 = arith.constant 0 : i32
    %c0_i32_2 = arith.constant 0 : i32
    return %c0_i32, %c0_i32_0, %c0_i32_1 : i32, i32, i32
  }
  func.func @transform_9(%arg0: i32) -> (i32, i32, i32) {
    %c0_i32 = arith.constant 0 : i32
    %c0_i32_0 = arith.constant 0 : i32
    %c0_i32_1 = arith.constant 0 : i32
    %c0_i32_2 = arith.constant 0 : i32
    return %c0_i32, %c0_i32_0, %c0_i32_1 : i32, i32, i32
  }
  func.func @transform_10(%arg0: i32) -> (i32, i32, i32) {
    %c0_i32 = arith.constant 0 : i32
    %c0_i32_0 = arith.constant 0 : i32
    %c0_i32_1 = arith.constant 0 : i32
    %c0_i32_2 = arith.constant 0 : i32
    return %c0_i32, %c0_i32_0, %c0_i32_1 : i32, i32, i32
  }
  func.func @transform_11(%arg0: i32) -> (i32, i32, i32) {
    %c0_i32 = arith.constant 0 : i32
    %c0_i32_0 = arith.constant 0 : i32
    %c0_i32_1 = arith.constant 0 : i32
    %c0_i32_2 = arith.constant 0 : i32
    return %c0_i32, %c0_i32_0, %c0_i32_1 : i32, i32, i32
  }
  func.func @transform_12(%arg0: i32) -> (i32, i32, i32) {
    %c0_i32 = arith.constant 0 : i32
    %c0_i32_0 = arith.constant 0 : i32
    %c0_i32_1 = arith.constant 0 : i32
    %c0_i32_2 = arith.constant 0 : i32
    return %c0_i32, %c0_i32_0, %c0_i32_1 : i32, i32, i32
  }
  func.func @transform_13(%arg0: i32) -> (i32, i32, i32) {
    %c0_i32 = arith.constant 0 : i32
    %c0_i32_0 = arith.constant 0 : i32
    %c0_i32_1 = arith.constant 0 : i32
    %c0_i32_2 = arith.constant 0 : i32
    return %c0_i32, %c0_i32_0, %c0_i32_1 : i32, i32, i32
  }
  func.func @transform_14(%arg0: i32) -> (i32, i32) {
    %c0_i32 = arith.constant 0 : i32
    %c0_i32_0 = arith.constant 0 : i32
    %c0_i32_1 = arith.constant 0 : i32
    return %c0_i32, %c0_i32_0 : i32, i32
  }
  func.func @transform_15(%arg0: i32) -> (i32, i32) {
    %c0_i32 = arith.constant 0 : i32
    %c0_i32_0 = arith.constant 0 : i32
    %c0_i32_1 = arith.constant 0 : i32
    return %c0_i32, %c0_i32_0 : i32, i32
  }
  func.func @transform_16(%arg0: i32) -> (i32, i32) {
    %c0_i32 = arith.constant 0 : i32
    %c0_i32_0 = arith.constant 0 : i32
    %c0_i32_1 = arith.constant 0 : i32
    return %c0_i32, %c0_i32_0 : i32, i32
  }
  func.func @transform_17(%arg0: i32) -> (i32, i32) {
    %c0_i32 = arith.constant 0 : i32
    %c0_i32_0 = arith.constant 0 : i32
    %c0_i32_1 = arith.constant 0 : i32
    return %c0_i32, %c0_i32_0 : i32, i32
  }
  func.func @transform_18(%arg0: i32) -> (i32, i32) {
    %c0_i32 = arith.constant 0 : i32
    %c0_i32_0 = arith.constant 0 : i32
    %c0_i32_1 = arith.constant 0 : i32
    return %c0_i32, %c0_i32_0 : i32, i32
  }
  func.func @transform_19(%arg0: i32) -> (i32, i32) {
    %c0_i32 = arith.constant 0 : i32
    %c0_i32_0 = arith.constant 0 : i32
    return %arg0, %c0_i32 : i32, i32
  }
}

</mosaic_0001>

<llo_original>
// kernel: nfed_forward.1
$region0: #{nfed_forward.1}
  #allocation0 [shape = 'u32[]', space=smem, size = 0x4, offset = 0x4, fixed_abs, tag = 'smem constant byte address 0x4 - core index']
  #allocation1 [shape = 'u32[144,128]{1,0:T(1,128)}', space=vmem, size = 0x12000, scoped, tag = 'internal scratch']
  #allocation2 [shape = 'f32[1,1]{1,0:T(1,128)S(1)}', space=vmem, size = 0x200, scoped, tag = 'scoped memory for nfed_forward.1']
  %s0 = inlined_call_operand.vmem [shape: f32[2,16], index: 0, kind: input, shape index: {}]
  %s1 = inlined_call_operand.vmem [shape: f32[8,5], index: 1, kind: input, shape index: {}]
  %s2 = inlined_call_operand.vmem [shape: f32[8], index: 2, kind: input, shape index: {}]
  %s3 = inlined_call_operand.vmem [shape: bf16[2,16,16], index: 3, kind: input, shape index: {}]
  %s4 = inlined_call_operand.vmem [shape: f32[2,1,16], index: 4, kind: input, shape index: {}]
  %s5 = inlined_call_operand.vmem [shape: f32[2,1,16], index: 5, kind: input, shape index: {}]
  %s6 = inlined_call_operand.vmem [shape: f32[2,1,16], index: 6, kind: input, shape index: {}]
  %s7 = inlined_call_operand.vmem [shape: f32[2,1,16], index: 7, kind: input, shape index: {}]
  %s8 = inlined_call_operand.vmem [shape: f32[2,1,16], index: 8, kind: input, shape index: {}]
  %s9 = inlined_call_operand.vmem [shape: bf16[2,16,32], index: 9, kind: input, shape index: {}]
  %s10 = inlined_call_operand.vmem [shape: f32[2,1,32], index: 10, kind: input, shape index: {}]
  %s11 = inlined_call_operand.vmem [shape: bf16[2,32,16], index: 11, kind: input, shape index: {}]
  %s12 = inlined_call_operand.vmem [shape: f32[2,1,16], index: 12, kind: input, shape index: {}]
  %s13 = inlined_call_operand.vmem [shape: bf16[4,16,8], index: 13, kind: input, shape index: {}]
  %s14 = inlined_call_operand.vmem [shape: f32[1,8], index: 14, kind: input, shape index: {}]
  %s15 = inlined_call_operand.vmem [shape: bf16[8,4], index: 15, kind: input, shape index: {}]
  %s16 = inlined_call_operand.vmem [shape: f32[1,4], index: 16, kind: input, shape index: {}]
  %s17 = inlined_call_operand.vmem [shape: bf16[4,1], index: 17, kind: input, shape index: {}]
  %s18 = inlined_call_operand.<no memory space> [shape: f32[1,1], index: 18, kind: input, shape index: {}]
  %s19 = inlined_call_operand.vmem [shape: f32[2,1], index: 19, kind: output, shape index: {}]
  %s20 = sld [smem:[#allocation0]]
  $region94: #{nfed_forward.1} parent=0
    _
  %s22 = ssub.s32 1, %s20
  %s23 = scalar_select 0, %s22, %s20
  %v24 = vstv %s18
  %25 = vst [vmem:[#allocation2] sm:$0x1] %v24
  $region1: #{nfed_forward.1} parent=0
    #allocation3 [shape = 'u8[4096]{0}', space=smem, size = 0x1000, scoped, tag = 'input window, operand 1, single buffered']
    #allocation4 [shape = 's32[1]{0}', space=sflag, size = 0x4, scoped, tag = 'scoped memory for nfed_forward.1']
    #allocation5 [shape = 'u8[512]{0}', space=smem, size = 0x200, scoped, tag = 'input window, operand 2, single buffered']
    #allocation6 [shape = 's32[1]{0}', space=sflag, size = 0x4, scoped, tag = 'scoped memory for nfed_forward.1']
    %26 = vsyncpa [#allocation4], 0
    %27 = vsyncpa [#allocation6], 0
    // Predicated region
    $region2: #{nfed_forward.1} parent=1 // pred_check
      _
    $region3: #{nfed_forward.1} parent=1 // pred_check_branch
      %29 = sbr.rel (0) target = $region5
    $region4: #{nfed_forward.1} parent=1 // pred_region
      _
    $region5: #{nfed_forward.1} parent=1 // pred_fallthru
      _
    // Predicated region
    $region6: #{nfed_forward.1} parent=1 // pred_check
      _
    $region7: #{nfed_forward.1} parent=1 // pred_check_branch
      %31 = sbr.rel (0) target = $region9
    $region8: #{nfed_forward.1} parent=1 // pred_region
      %s33 = ssub.s32 128, 128
      %34 = vsyncadd [#allocation4], %s33
      %s36 = sshll.u32 %s1, 4
      %s37 = int_to_ptr.vmem [resolvable:$true] %s36
      %39 = dma.vmem_to_smem %s37, 128, [#allocation3], [#allocation4]
    $region9: #{nfed_forward.1} parent=1 // pred_fallthru
      _
    // Predicated region
    $region10: #{nfed_forward.1} parent=1 // pred_check
      _
    $region11: #{nfed_forward.1} parent=1 // pred_check_branch
      %41 = sbr.rel (0) target = $region13
    $region12: #{nfed_forward.1} parent=1 // pred_region
      %s43 = ssub.s32 16, 16
      %44 = vsyncadd [#allocation6], %s43
      %s46 = sshll.u32 %s2, 4
      %s47 = int_to_ptr.vmem [resolvable:$true] %s46
      %49 = dma.vmem_to_smem %s47, 16, [#allocation5], [#allocation6]
    $region13: #{nfed_forward.1} parent=1 // pred_fallthru
      _
    // Predicated region
    $region14: #{nfed_forward.1} parent=1 // pred_check
      _
    $region15: #{nfed_forward.1} parent=1 // pred_check_branch
      %51 = sbr.rel (0) target = $region17
    $region16: #{nfed_forward.1} parent=1 // pred_region
      _
    $region17: #{nfed_forward.1} parent=1 // pred_fallthru
      _
    // Predicated region
    $region18: #{nfed_forward.1} parent=1 // pred_check
      _
    $region19: #{nfed_forward.1} parent=1 // pred_check_branch
      %53 = sbr.rel (0) target = $region21
    $region20: #{nfed_forward.1} parent=1 // pred_region
      _
    $region21: #{nfed_forward.1} parent=1 // pred_fallthru
      _
    // Predicated region
    $region22: #{nfed_forward.1} parent=1 // pred_check
      _
    $region23: #{nfed_forward.1} parent=1 // pred_check_branch
      %55 = sbr.rel (0) target = $region25
    $region24: #{nfed_forward.1} parent=1 // pred_region
      _
    $region25: #{nfed_forward.1} parent=1 // pred_fallthru
      _
    // Predicated region
    $region26: #{nfed_forward.1} parent=1 // pred_check
      _
    $region27: #{nfed_forward.1} parent=1 // pred_check_branch
      %57 = sbr.rel (0) target = $region29
    $region28: #{nfed_forward.1} parent=1 // pred_region
      _
    $region29: #{nfed_forward.1} parent=1 // pred_fallthru
      _
    // Predicated region
    $region30: #{nfed_forward.1} parent=1 // pred_check
      _
    $region31: #{nfed_forward.1} parent=1 // pred_check_branch
      %59 = sbr.rel (0) target = $region33
    $region32: #{nfed_forward.1} parent=1 // pred_region
      _
    $region33: #{nfed_forward.1} parent=1 // pred_fallthru
      _
    // Predicated region
    $region34: #{nfed_forward.1} parent=1 // pred_check
      _
    $region35: #{nfed_forward.1} parent=1 // pred_check_branch
      %61 = sbr.rel (0) target = $region37
    $region36: #{nfed_forward.1} parent=1 // pred_region
      _
    $region37: #{nfed_forward.1} parent=1 // pred_fallthru
      _
    // Predicated region
    $region38: #{nfed_forward.1} parent=1 // pred_check
      _
    $region39: #{nfed_forward.1} parent=1 // pred_check_branch
      %63 = sbr.rel (0) target = $region41
    $region40: #{nfed_forward.1} parent=1 // pred_region
      _
    $region41: #{nfed_forward.1} parent=1 // pred_fallthru
      _
    // Predicated region
    $region42: #{nfed_forward.1} parent=1 // pred_check
      _
    $region43: #{nfed_forward.1} parent=1 // pred_check_branch
      %65 = sbr.rel (0) target = $region45
    $region44: #{nfed_forward.1} parent=1 // pred_region
      _
    $region45: #{nfed_forward.1} parent=1 // pred_fallthru
      _
    // Predicated region
    $region46: #{nfed_forward.1} parent=1 // pred_check
      _
    $region47: #{nfed_forward.1} parent=1 // pred_check_branch
      %67 = sbr.rel (0) target = $region49
    $region48: #{nfed_forward.1} parent=1 // pred_region
      _
    $region49: #{nfed_forward.1} parent=1 // pred_fallthru
      _
    // Predicated region
    $region50: #{nfed_forward.1} parent=1 // pred_check
      _
    $region51: #{nfed_forward.1} parent=1 // pred_check_branch
      %69 = sbr.rel (0) target = $region53
    $region52: #{nfed_forward.1} parent=1 // pred_region
      _
    $region53: #{nfed_forward.1} parent=1 // pred_fallthru
      _
    // Predicated region
    $region54: #{nfed_forward.1} parent=1 // pred_check
      _
    $region55: #{nfed_forward.1} parent=1 // pred_check_branch
      %71 = sbr.rel (0) target = $region57
    $region56: #{nfed_forward.1} parent=1 // pred_region
      _
    $region57: #{nfed_forward.1} parent=1 // pred_fallthru
      _
    // Predicated region
    $region58: #{nfed_forward.1} parent=1 // pred_check
      _
    $region59: #{nfed_forward.1} parent=1 // pred_check_branch
      %73 = sbr.rel (0) target = $region61
    $region60: #{nfed_forward.1} parent=1 // pred_region
      _
    $region61: #{nfed_forward.1} parent=1 // pred_fallthru
      _
    // Predicated region
    $region62: #{nfed_forward.1} parent=1 // pred_check
      _
    $region63: #{nfed_forward.1} parent=1 // pred_check_branch
      %75 = sbr.rel (0) target = $region65
    $region64: #{nfed_forward.1} parent=1 // pred_region
      _
    $region65: #{nfed_forward.1} parent=1 // pred_fallthru
      _
    // Predicated region
    $region66: #{nfed_forward.1} parent=1 // pred_check
      _
    $region67: #{nfed_forward.1} parent=1 // pred_check_branch
      %77 = sbr.rel (0) target = $region69
    $region68: #{nfed_forward.1} parent=1 // pred_region
      _
    $region69: #{nfed_forward.1} parent=1 // pred_fallthru
      _
    // Predicated region
    $region70: #{nfed_forward.1} parent=1 // pred_check
      _
    $region71: #{nfed_forward.1} parent=1 // pred_check_branch
      %79 = sbr.rel (0) target = $region73
    $region72: #{nfed_forward.1} parent=1 // pred_region
      _
    $region73: #{nfed_forward.1} parent=1 // pred_fallthru
      _
    // Predicated region
    $region74: #{nfed_forward.1} parent=1 // pred_check
      _
    $region75: #{nfed_forward.1} parent=1 // pred_check_branch
      %81 = sbr.rel (0) target = $region77
    $region76: #{nfed_forward.1} parent=1 // pred_region
      _
    $region77: #{nfed_forward.1} parent=1 // pred_fallthru
      _
    // Predicated region
    $region78: #{nfed_forward.1} parent=1 // pred_check
      _
    $region79: #{nfed_forward.1} parent=1 // pred_check_branch
      %83 = sbr.rel (0) target = $region81
    $region80: #{nfed_forward.1} parent=1 // pred_region
      %84 = dma.done [#allocation4], 128
    $region81: #{nfed_forward.1} parent=1 // pred_fallthru
      _
    // Predicated region
    $region82: #{nfed_forward.1} parent=1 // pred_check
      _
    $region83: #{nfed_forward.1} parent=1 // pred_check_branch
      %86 = sbr.rel (0) target = $region85
    $region84: #{nfed_forward.1} parent=1 // pred_region
      %87 = dma.done [#allocation6], 16
    $region85: #{nfed_forward.1} parent=1 // pred_fallthru
      _
    %88 = sfence
    %v90 = vld [vmem:[%s0] sm:$0x3]
    %92 = vrot.lane.b32.xlu0 %v90, 2
    %v93 = vpop.permute.xlu0 %92
    %vm95 = vcmask 15360
    %v96 = vsel %vm95, 0.0, %v93
    %vm97 = vcmask 146432
    %v98 = vsel %vm97, %v96, 0.0
    %s99 = sld [smem:[#allocation3]]
    %v100 = vstv %s99
    %v101 = vmul.f32 %v100, %v98
    %v102 = vadd.f32 %v101, 0.0
    %s103 = sld [smem:[#allocation3 + $0x80]]
    %v104 = vstv %s103
    %v105 = vmul.f32 %v104, %v98
    %v106 = vadd.f32 %v105, 0.0
    %s107 = sld [smem:[#allocation3 + $0x1]]
    %v108 = vstv %s107
    %v109 = vmul.f32 %v108, %v98
    %111 = vrot.lane.b32.xlu0 %v109, 127
    %v112 = vpop.permute.xlu0 %111
    %v114 = vadd.f32 %v102, %v112
    %s115 = sld [smem:[#allocation3 + $0x81]]
    %v116 = vstv %s115
    %v117 = vmul.f32 %v116, %v98
    %119 = vrot.lane.b32.xlu0 %v117, 127
    %v120 = vpop.permute.xlu0 %119
    %v122 = vadd.f32 %v106, %v120
    %s123 = sld [smem:[#allocation3 + $0x2]]
    %v124 = vstv %s123
    %v125 = vmul.f32 %v124, %v98
    %127 = vrot.lane.b32.xlu0 %v125, 126
    %v128 = vpop.permute.xlu0 %127
    %v130 = vadd.f32 %v114, %v128
    %s131 = sld [smem:[#allocation3 + $0x82]]
    %v132 = vstv %s131
    %v133 = vmul.f32 %v132, %v98
    %135 = vrot.lane.b32.xlu0 %v133, 126
    %v136 = vpop.permute.xlu0 %135
    %v138 = vadd.f32 %v122, %v136
    %s139 = sld [smem:[#allocation3 + $0x3]]
    %v140 = vstv %s139
    %v141 = vmul.f32 %v140, %v98
    %143 = vrot.lane.b32.xlu0 %v141, 125
    %v144 = vpop.permute.xlu0 %143
    %v146 = vadd.f32 %v130, %v144
    %s147 = sld [smem:[#allocation3 + $0x83]]
    %v148 = vstv %s147
    %v149 = vmul.f32 %v148, %v98
    %151 = vrot.lane.b32.xlu0 %v149, 125
    %v152 = vpop.permute.xlu0 %151
    %v154 = vadd.f32 %v138, %v152
    %s155 = sld [smem:[#allocation3 + $0x4]]
    %v156 = vstv %s155
    %v157 = vmul.f32 %v156, %v98
    %159 = vrot.lane.b32.xlu0 %v157, 124
    %v160 = vpop.permute.xlu0 %159
    %v162 = vadd.f32 %v146, %v160
    %s163 = sld [smem:[#allocation3 + $0x84]]
    %v164 = vstv %s163
    %v165 = vmul.f32 %v164, %v98
    %167 = vrot.lane.b32.xlu0 %v165, 124
    %v168 = vpop.permute.xlu0 %167
    %v170 = vadd.f32 %v154, %v168
    %s171 = sld [smem:[#allocation5]]
    %v172 = vstv %s171
    %v173 = vadd.f32 %v162, %v172
    %v174 = vmax.f32 %v173, 0.0
    %s175 = sld [smem:[#allocation5 + $0x1]]
    %v176 = vstv %s175
    %v177 = vadd.f32 %v170, %v176
    %v178 = vmax.f32 %v177, 0.0
    %v179 = vmul.f32 %v174, %v174
    %v180 = vmul.f32 %v178, %v178
    %v181 = vadd.f32 %v179, %v180
    %v182 = vrsqrt.pop %v181
    %v183 = vmul.f32 %v181, %v182
    %vm184 = vcmp.eq.f32.partialorder %v181, inf
    %v185 = vsel %vm184, %v181, %v183
    %vm186 = vcmp.eq.f32.partialorder %v181, 0.0
    %v187 = vand.u32 %v181, 2147483648
    %v188 = vsel %vm186, %v187, %v185
    %s189 = sld [smem:[#allocation3 + $0x100]]
    %v190 = vstv %s189
    %v191 = vmul.f32 %v190, %v98
    %v192 = vadd.f32 %v191, 0.0
    %s193 = sld [smem:[#allocation3 + $0x180]]
    %v194 = vstv %s193
    %v195 = vmul.f32 %v194, %v98
    %v196 = vadd.f32 %v195, 0.0
    %s197 = sld [smem:[#allocation3 + $0x101]]
    %v198 = vstv %s197
    %v199 = vmul.f32 %v198, %v98
    %201 = vrot.lane.b32.xlu0 %v199, 127
    %v202 = vpop.permute.xlu0 %201
    %v204 = vadd.f32 %v192, %v202
    %s205 = sld [smem:[#allocation3 + $0x181]]
    %v206 = vstv %s205
    %v207 = vmul.f32 %v206, %v98
    %209 = vrot.lane.b32.xlu0 %v207, 127
    %v210 = vpop.permute.xlu0 %209
    %v212 = vadd.f32 %v196, %v210
    %s213 = sld [smem:[#allocation3 + $0x102]]
    %v214 = vstv %s213
    %v215 = vmul.f32 %v214, %v98
    %217 = vrot.lane.b32.xlu0 %v215, 126
    %v218 = vpop.permute.xlu0 %217
    %v220 = vadd.f32 %v204, %v218
    %s221 = sld [smem:[#allocation3 + $0x182]]
    %v222 = vstv %s221
    %v223 = vmul.f32 %v222, %v98
    %225 = vrot.lane.b32.xlu0 %v223, 126
    %v226 = vpop.permute.xlu0 %225
    %v228 = vadd.f32 %v212, %v226
    %s229 = sld [smem:[#allocation3 + $0x103]]
    %v230 = vstv %s229
    %v231 = vmul.f32 %v230, %v98
    %233 = vrot.lane.b32.xlu0 %v231, 125
    %v234 = vpop.permute.xlu0 %233
    %v236 = vadd.f32 %v220, %v234
    %s237 = sld [smem:[#allocation3 + $0x183]]
    %v238 = vstv %s237
    %v239 = vmul.f32 %v238, %v98
    %241 = vrot.lane.b32.xlu0 %v239, 125
    %v242 = vpop.permute.xlu0 %241
    %v244 = vadd.f32 %v228, %v242
    %s245 = sld [smem:[#allocation3 + $0x104]]
    %v246 = vstv %s245
    %v247 = vmul.f32 %v246, %v98
    %249 = vrot.lane.b32.xlu0 %v247, 124
    %v250 = vpop.permute.xlu0 %249
    %v252 = vadd.f32 %v236, %v250
    %s253 = sld [smem:[#allocation3 + $0x184]]
    %v254 = vstv %s253
    %v255 = vmul.f32 %v254, %v98
    %257 = vrot.lane.b32.xlu0 %v255, 124
    %v258 = vpop.permute.xlu0 %257
    %v260 = vadd.f32 %v244, %v258
    %s261 = sld [smem:[#allocation5 + $0x2]]
    %v262 = vstv %s261
    %v263 = vadd.f32 %v252, %v262
    %v264 = vmax.f32 %v263, 0.0
    %s265 = sld [smem:[#allocation5 + $0x3]]
    %v266 = vstv %s265
    %v267 = vadd.f32 %v260, %v266
    %v268 = vmax.f32 %v267, 0.0
    %v269 = vmul.f32 %v264, %v264
    %v270 = vmul.f32 %v268, %v268
    %v271 = vadd.f32 %v269, %v270
    %v272 = vrsqrt.pop %v271
    %v273 = vmul.f32 %v271, %v272
    %vm274 = vcmp.eq.f32.partialorder %v271, inf
    %v275 = vsel %vm274, %v271, %v273
    %vm276 = vcmp.eq.f32.partialorder %v271, 0.0
    %v277 = vand.u32 %v271, 2147483648
    %v278 = vsel %vm276, %v277, %v275
    %s279 = sld [smem:[#allocation3 + $0x200]]
    %v280 = vstv %s279
    %v281 = vmul.f32 %v280, %v98
    %v282 = vadd.f32 %v281, 0.0
    %s283 = sld [smem:[#allocation3 + $0x280]]
    %v284 = vstv %s283
    %v285 = vmul.f32 %v284, %v98
    %v286 = vadd.f32 %v285, 0.0
    %s287 = sld [smem:[#allocation3 + $0x201]]
    %v288 = vstv %s287
    %v289 = vmul.f32 %v288, %v98
    %291 = vrot.lane.b32.xlu0 %v289, 127
    %v292 = vpop.permute.xlu0 %291
    %v294 = vadd.f32 %v282, %v292
    %s295 = sld [smem:[#allocation3 + $0x281]]
    %v296 = vstv %s295
    %v297 = vmul.f32 %v296, %v98
    %299 = vrot.lane.b32.xlu0 %v297, 127
    %v300 = vpop.permute.xlu0 %299
    %v302 = vadd.f32 %v286, %v300
    %s303 = sld [smem:[#allocation3 + $0x202]]
    %v304 = vstv %s303
    %v305 = vmul.f32 %v304, %v98
    %307 = vrot.lane.b32.xlu0 %v305, 126
    %v308 = vpop.permute.xlu0 %307
    %v310 = vadd.f32 %v294, %v308
    %s311 = sld [smem:[#allocation3 + $0x282]]
    %v312 = vstv %s311
    %v313 = vmul.f32 %v312, %v98
    %315 = vrot.lane.b32.xlu0 %v313, 126
    %v316 = vpop.permute.xlu0 %315
    %v318 = vadd.f32 %v302, %v316
    %s319 = sld [smem:[#allocation3 + $0x203]]
    %v320 = vstv %s319
    %v321 = vmul.f32 %v320, %v98
    %323 = vrot.lane.b32.xlu0 %v321, 125
    %v324 = vpop.permute.xlu0 %323
    %v326 = vadd.f32 %v310, %v324
    %s327 = sld [smem:[#allocation3 + $0x283]]
    %v328 = vstv %s327
    %v329 = vmul.f32 %v328, %v98
    %331 = vrot.lane.b32.xlu0 %v329, 125
    %v332 = vpop.permute.xlu0 %331
    %v334 = vadd.f32 %v318, %v332
    %s335 = sld [smem:[#allocation3 + $0x204]]
    %v336 = vstv %s335
    %v337 = vmul.f32 %v336, %v98
    %339 = vrot.lane.b32.xlu0 %v337, 124
    %v340 = vpop.permute.xlu0 %339
    %v342 = vadd.f32 %v326, %v340
    %s343 = sld [smem:[#allocation3 + $0x284]]
    %v344 = vstv %s343
    %v345 = vmul.f32 %v344, %v98
    %347 = vrot.lane.b32.xlu0 %v345, 124
    %v348 = vpop.permute.xlu0 %347
    %v350 = vadd.f32 %v334, %v348
    %s351 = sld [smem:[#allocation5 + $0x4]]
    %v352 = vstv %s351
    %v353 = vadd.f32 %v342, %v352
    %v354 = vmax.f32 %v353, 0.0
    %s355 = sld [smem:[#allocation5 + $0x5]]
    %v356 = vstv %s355
    %v357 = vadd.f32 %v350, %v356
    %v358 = vmax.f32 %v357, 0.0
    %v359 = vmul.f32 %v354, %v354
    %v360 = vmul.f32 %v358, %v358
    %v361 = vadd.f32 %v359, %v360
    %v362 = vrsqrt.pop %v361
    %v363 = vmul.f32 %v361, %v362
    %vm364 = vcmp.eq.f32.partialorder %v361, inf
    %v365 = vsel %vm364, %v361, %v363
    %vm366 = vcmp.eq.f32.partialorder %v361, 0.0
    %v367 = vand.u32 %v361, 2147483648
    %v368 = vsel %vm366, %v367, %v365
    %s369 = sld [smem:[#allocation3 + $0x300]]
    %v370 = vstv %s369
    %v371 = vmul.f32 %v370, %v98
    %v372 = vadd.f32 %v371, 0.0
    %s373 = sld [smem:[#allocation3 + $0x380]]
    %v374 = vstv %s373
    %v375 = vmul.f32 %v374, %v98
    %v376 = vadd.f32 %v375, 0.0
    %s377 = sld [smem:[#allocation3 + $0x301]]
    %v378 = vstv %s377
    %v379 = vmul.f32 %v378, %v98
    %381 = vrot.lane.b32.xlu0 %v379, 127
    %v382 = vpop.permute.xlu0 %381
    %v384 = vadd.f32 %v372, %v382
    %s385 = sld [smem:[#allocation3 + $0x381]]
    %v386 = vstv %s385
    %v387 = vmul.f32 %v386, %v98
    %389 = vrot.lane.b32.xlu0 %v387, 127
    %v390 = vpop.permute.xlu0 %389
    %v392 = vadd.f32 %v376, %v390
    %s393 = sld [smem:[#allocation3 + $0x302]]
    %v394 = vstv %s393
    %v395 = vmul.f32 %v394, %v98
    %397 = vrot.lane.b32.xlu0 %v395, 126
    %v398 = vpop.permute.xlu0 %397
    %v400 = vadd.f32 %v384, %v398
    %s401 = sld [smem:[#allocation3 + $0x382]]
    %v402 = vstv %s401
    %v403 = vmul.f32 %v402, %v98
    %405 = vrot.lane.b32.xlu0 %v403, 126
    %v406 = vpop.permute.xlu0 %405
    %v408 = vadd.f32 %v392, %v406
    %s409 = sld [smem:[#allocation3 + $0x303]]
    %v410 = vstv %s409
    %v411 = vmul.f32 %v410, %v98
    %413 = vrot.lane.b32.xlu0 %v411, 125
    %v414 = vpop.permute.xlu0 %413
    %v416 = vadd.f32 %v400, %v414
    %s417 = sld [smem:[#allocation3 + $0x383]]
    %v418 = vstv %s417
    %v419 = vmul.f32 %v418, %v98
    %421 = vrot.lane.b32.xlu0 %v419, 125
    %v422 = vpop.permute.xlu0 %421
    %v424 = vadd.f32 %v408, %v422
    %s425 = sld [smem:[#allocation3 + $0x304]]
    %v426 = vstv %s425
    %v427 = vmul.f32 %v426, %v98
    %429 = vrot.lane.b32.xlu0 %v427, 124
    %v430 = vpop.permute.xlu0 %429
    %v432 = vadd.f32 %v416, %v430
    %s433 = sld [smem:[#allocation3 + $0x384]]
    %v434 = vstv %s433
    %v435 = vmul.f32 %v434, %v98
    %437 = vrot.lane.b32.xlu0 %v435, 124
    %v438 = vpop.permute.xlu0 %437
    %v440 = vadd.f32 %v424, %v438
    %s441 = sld [smem:[#allocation5 + $0x6]]
    %v442 = vstv %s441
    %v443 = vadd.f32 %v432, %v442
    %v444 = vmax.f32 %v443, 0.0
    %s445 = sld [smem:[#allocation5 + $0x7]]
    %v446 = vstv %s445
    %v447 = vadd.f32 %v440, %v446
    %v448 = vmax.f32 %v447, 0.0
    %v449 = vmul.f32 %v444, %v444
    %v450 = vmul.f32 %v448, %v448
    %v451 = vadd.f32 %v449, %v450
    %v452 = vrsqrt.pop %v451
    %v453 = vmul.f32 %v451, %v452
    %vm454 = vcmp.eq.f32.partialorder %v451, inf
    %v455 = vsel %vm454, %v451, %v453
    %vm456 = vcmp.eq.f32.partialorder %v451, 0.0
    %v457 = vand.u32 %v451, 2147483648
    %v458 = vsel %vm456, %v457, %v455
    %v460 = vrot.slane %v278, 6
    %v463 = vrot.slane %v368, 4
    %v466 = vrot.slane %v458, 2
    %vm468 = vcmask 1041408
    %v469 = vsel %vm468, %v188, %v460
    %vm470 = vcmask 1043456
    %v471 = vsel %vm470, %v469, %v463
    %vm472 = vcmask 1045504
    %v473 = vsel %vm472, %v471, %v466
    %vm474 = vcmask 130048
    %v475 = vsel %vm474, %v473, 0.0
    %476 = vadd.xlane.f32.xlu0 %v475
    %v477 = vpop.xlane.xlu0 %476
    %v478 = vrcp.pop 16.0
    %v479 = vmul.f32 %v477, %v478
    %v480 = vsub.f32 %v473, %v479
    %v481 = vmul.f32 %v480, %v480
    %v482 = vsel %vm474, %v481, 0.0
    %483 = vadd.xlane.f32.xlu0 %v482
    %v484 = vpop.xlane.xlu0 %483
    %v485 = vmul.f32 %v484, %v478
    %v486 = vadd.f32 %v485, 1e-05
    %v487 = vrsqrt.pop %v486
    %v488 = vmul.f32 %v480, %v487
    %v489 = vld [vmem:[%s5] sm:$0x1]
    %v491 = vlaneseq
    %v492 = vshrl.u32 %v491, 7
    %v493 = vsub.s32 0, %v492
    %v494 = vrot.slane %v489, %v493
    %v496 = vmul.f32 %v488, %v494
    %v497 = vld [vmem:[%s6] sm:$0x1]
    %v499 = vlaneseq
    %v500 = vshrl.u32 %v499, 7
    %v501 = vsub.s32 0, %v500
    %v502 = vrot.slane %v497, %v501
    %v504 = vadd.f32 %v496, %v502
    %v505 = vpack.c.bf16 %v504, %v504
    %v506 = vld [vmem:[%s3] sm:$0xf]
    %v507 = vld [vmem:[%s3 + $0x4] sm:$0xf]
    %v508 = vld [vmem:[%s4] sm:$0x1]
    %v510 = vlaneseq
    %v511 = vshrl.u32 %v510, 7
    %v512 = vsub.s32 0, %v511
    %v513 = vrot.slane %v508, %v512
    %v517 = vunpack.c.l.b16 %v506
    %v518 = vunpack.c.l.b16 %v507
    %v519 = vpack.c.b16 %v518, %v517
    %v522 = vsel %vm474, %v505, 0
    %524 = vmatprep.subr.bf16.mxu0 0
    %525 = vmatpush1.bf16.msra.mxu0 0
    %526 = vmatprep.subr.bf16.mxu0 0
    %527 = vmatpush1.bf16.msra.mxu0 0
    %528 = vmatprep.subr.bf16.mxu0 0
    %529 = vmatpush1.bf16.msra.mxu0 0
    %530 = vmatprep.subr.bf16.mxu0 0
    %531 = vmatpush1.bf16.msra.mxu0 0
    %532 = vmatprep.subr.bf16.mxu0 0
    %533 = vmatpush1.bf16.msra.mxu0 0
    %534 = vmatprep.subr.bf16.mxu0 0
    %535 = vmatpush1.bf16.msra.mxu0 0
    %536 = vmatprep.subr.bf16.mxu0 0
    %537 = vmatpush1.bf16.msra.mxu0 0
    %538 = vmatprep.subr.bf16.mxu0 0
    %539 = vmatpush1.bf16.msra.mxu0 %v519
    %540 = vmatprep.subr.bf16.mxu0 0
    %541 = vmatpush2.bf16.msra.mxu0 0
    %542 = vmatprep.subr.bf16.mxu0 0
    %543 = vmatpush2.bf16.msra.mxu0 0
    %544 = vmatprep.subr.bf16.mxu0 0
    %545 = vmatpush2.bf16.msra.mxu0 0
    %546 = vmatprep.subr.bf16.mxu0 0
    %547 = vmatpush2.bf16.msra.mxu0 0
    %548 = vmatprep.subr.bf16.mxu0 0
    %549 = vmatpush2.bf16.msra.mxu0 0
    %550 = vmatprep.subr.bf16.mxu0 0
    %551 = vmatpush2.bf16.msra.mxu0 0
    %552 = vmatprep.subr.bf16.mxu0 0
    %553 = vmatpush2.bf16.msra.mxu0 0
    %554 = vmatprep.subr.bf16.mxu0 0
    %555 = vmatpush2.bf16.msra.mxu0 0
    %556 = vmatprep.mubr.bf16.mxu0 0
    %557 = vmatmul.mubr.bf16.gmra.mxu0 %v522
    %v558 = vpop.f32.mrf.mxu0
    %v559 = vadd.f32 %v513, %v558
    %v560 = vpop.f32.mrf.mxu0
    %v561 = vpop.f32.mrf.mxu0
    %v562 = vpop.f32.mrf.mxu0
    %563 = vdwg.mxu0
    %v564 = vadd.f32 %v473, %v559
    %v565 = vsel %vm474, %v564, 0.0
    %566 = vadd.xlane.f32.xlu0 %v565
    %v567 = vpop.xlane.xlu0 %566
    %v568 = vmul.f32 %v567, %v478
    %v569 = vsub.f32 %v564, %v568
    %v570 = vmul.f32 %v569, %v569
    %v571 = vsel %vm474, %v570, 0.0
    %572 = vadd.xlane.f32.xlu0 %v571
    %v573 = vpop.xlane.xlu0 %572
    %v574 = vmul.f32 %v573, %v478
    %v575 = vadd.f32 %v574, 1e-05
    %v576 = vrsqrt.pop %v575
    %v577 = vmul.f32 %v569, %v576
    %v578 = vld [vmem:[%s7] sm:$0x1]
    %v580 = vlaneseq
    %v581 = vshrl.u32 %v580, 7
    %v582 = vsub.s32 0, %v581
    %v583 = vrot.slane %v578, %v582
    %v585 = vmul.f32 %v577, %v583
    %v586 = vld [vmem:[%s8] sm:$0x1]
    %v588 = vlaneseq
    %v589 = vshrl.u32 %v588, 7
    %v590 = vsub.s32 0, %v589
    %v591 = vrot.slane %v586, %v590
    %v593 = vadd.f32 %v585, %v591
    %v594 = vpack.c.bf16 %v593, %v593
    %v595 = vld [vmem:[%s9] sm:$0xf]
    %v596 = vld [vmem:[%s9 + $0x4] sm:$0xf]
    %v597 = vld [vmem:[%s10] sm:$0x1]
    %v599 = vlaneseq
    %v600 = vshrl.u32 %v599, 7
    %v601 = vsub.s32 0, %v600
    %v602 = vrot.slane %v597, %v601
    %v606 = vunpack.c.l.b16 %v595
    %v607 = vunpack.c.l.b16 %v596
    %v608 = vpack.c.b16 %v607, %v606
    %v611 = vsel %vm474, %v594, 0
    %613 = vmatprep.subr.bf16.mxu0 0
    %614 = vmatpush1.bf16.msra.mxu0 0
    %615 = vmatprep.subr.bf16.mxu0 0
    %616 = vmatpush1.bf16.msra.mxu0 0
    %617 = vmatprep.subr.bf16.mxu0 0
    %618 = vmatpush1.bf16.msra.mxu0 0
    %619 = vmatprep.subr.bf16.mxu0 0
    %620 = vmatpush1.bf16.msra.mxu0 0
    %621 = vmatprep.subr.bf16.mxu0 0
    %622 = vmatpush1.bf16.msra.mxu0 0
    %623 = vmatprep.subr.bf16.mxu0 0
    %624 = vmatpush1.bf16.msra.mxu0 0
    %625 = vmatprep.subr.bf16.mxu0 0
    %626 = vmatpush1.bf16.msra.mxu0 0
    %627 = vmatprep.subr.bf16.mxu0 0
    %628 = vmatpush1.bf16.msra.mxu0 %v608
    %629 = vmatprep.subr.bf16.mxu0 0
    %630 = vmatpush2.bf16.msra.mxu0 0
    %631 = vmatprep.subr.bf16.mxu0 0
    %632 = vmatpush2.bf16.msra.mxu0 0
    %633 = vmatprep.subr.bf16.mxu0 0
    %634 = vmatpush2.bf16.msra.mxu0 0
    %635 = vmatprep.subr.bf16.mxu0 0
    %636 = vmatpush2.bf16.msra.mxu0 0
    %637 = vmatprep.subr.bf16.mxu0 0
    %638 = vmatpush2.bf16.msra.mxu0 0
    %639 = vmatprep.subr.bf16.mxu0 0
    %640 = vmatpush2.bf16.msra.mxu0 0
    %641 = vmatprep.subr.bf16.mxu0 0
    %642 = vmatpush2.bf16.msra.mxu0 0
    %643 = vmatprep.subr.bf16.mxu0 0
    %644 = vmatpush2.bf16.msra.mxu0 0
    %645 = vmatprep.mubr.bf16.mxu0 0
    %646 = vmatmul.mubr.bf16.gmra.mxu0 %v611
    %v647 = vpop.f32.mrf.mxu0
    %v648 = vadd.f32 %v602, %v647
    %v649 = vpop.f32.mrf.mxu0
    %v650 = vpop.f32.mrf.mxu0
    %v651 = vpop.f32.mrf.mxu0
    %652 = vdwg.mxu0
    %v653 = vmax.f32 %v648, 0.0
    %v654 = vpack.c.bf16 %v653, %v653
    %v655 = vld [vmem:[%s11] sm:$0xf]
    %v656 = vld [vmem:[%s11 + $0x4] sm:$0xf]
    %v657 = vld [vmem:[%s11 + $0x8] sm:$0xf]
    %v658 = vld [vmem:[%s11 + $0xc] sm:$0xf]
    %v663 = vunpack.c.l.b16 %v655
    %v664 = vunpack.c.l.b16 %v656
    %v665 = vunpack.c.l.b16 %v657
    %v666 = vunpack.c.l.b16 %v658
    %v667 = vpack.c.b16 %v664, %v663
    %v668 = vpack.c.b16 %v666, %v665
    %vm671 = vcmask 261120
    %v673 = vsel %vm671, %v654, 0
    %675 = vmatprep.subr.bf16.mxu0 0
    %676 = vmatpush1.bf16.msra.mxu0 0
    %677 = vmatprep.subr.bf16.mxu0 0
    %678 = vmatpush1.bf16.msra.mxu0 0
    %679 = vmatprep.subr.bf16.mxu0 0
    %680 = vmatpush1.bf16.msra.mxu0 0
    %681 = vmatprep.subr.bf16.mxu0 0
    %682 = vmatpush1.bf16.msra.mxu0 0
    %683 = vmatprep.subr.bf16.mxu0 0
    %684 = vmatpush1.bf16.msra.mxu0 0
    %685 = vmatprep.subr.bf16.mxu0 0
    %686 = vmatpush1.bf16.msra.mxu0 0
    %687 = vmatprep.subr.bf16.mxu0 0
    %688 = vmatpush1.bf16.msra.mxu0 %v668
    %689 = vmatprep.subr.bf16.mxu0 0
    %690 = vmatpush1.bf16.msra.mxu0 %v667
    %691 = vmatprep.subr.bf16.mxu0 0
    %692 = vmatpush2.bf16.msra.mxu0 0
    %693 = vmatprep.subr.bf16.mxu0 0
    %694 = vmatpush2.bf16.msra.mxu0 0
    %695 = vmatprep.subr.bf16.mxu0 0
    %696 = vmatpush2.bf16.msra.mxu0 0
    %697 = vmatprep.subr.bf16.mxu0 0
    %698 = vmatpush2.bf16.msra.mxu0 0
    %699 = vmatprep.subr.bf16.mxu0 0
    %700 = vmatpush2.bf16.msra.mxu0 0
    %701 = vmatprep.subr.bf16.mxu0 0
    %702 = vmatpush2.bf16.msra.mxu0 0
    %703 = vmatprep.subr.bf16.mxu0 0
    %704 = vmatpush2.bf16.msra.mxu0 0
    %705 = vmatprep.subr.bf16.mxu0 0
    %706 = vmatpush2.bf16.msra.mxu0 0
    %707 = vmatprep.mubr.bf16.mxu0 0
    %708 = vmatmul.mubr.bf16.gmra.mxu0 %v673
    %v709 = vpop.f32.mrf.mxu0
    %v710 = vadd.f32 0.0, %v709
    %v711 = vpop.f32.mrf.mxu0
    %v712 = vpop.f32.mrf.mxu0
    %v713 = vpop.f32.mrf.mxu0
    %714 = vdwg.mxu0
    %v715 = vadd.f32 %v593, %v710
    %v716 = vld [vmem:[%s12] sm:$0x1]
    %v718 = vlaneseq
    %v719 = vshrl.u32 %v718, 7
    %v720 = vsub.s32 0, %v719
    %v721 = vrot.slane %v716, %v720
    %v723 = vadd.f32 %v715, %v721
    %v724 = vsel %vm474, %v723, 0.0
    %725 = vadd.xlane.f32.xlu0 %v724
    %v726 = vpop.xlane.xlu0 %725
    %v727 = vmul.f32 %v726, %v478
    %v728 = vsub.f32 %v723, %v727
    %v729 = vmul.f32 %v728, %v728
    %v730 = vsel %vm474, %v729, 0.0
    %731 = vadd.xlane.f32.xlu0 %v730
    %v732 = vpop.xlane.xlu0 %731
    %v733 = vmul.f32 %v732, %v478
    %v734 = vadd.f32 %v733, 1e-05
    %v735 = vrsqrt.pop %v734
    %v736 = vmul.f32 %v728, %v735
    %s737 = scalar_lea.vmem %s5, 1
    %v738 = vld [vmem:[%s737] sm:$0x1]
    %v740 = vlaneseq
    %v741 = vshrl.u32 %v740, 7
    %v742 = vsub.s32 0, %v741
    %v743 = vrot.slane %v738, %v742
    %v745 = vmul.f32 %v736, %v743
    %s746 = scalar_lea.vmem %s6, 1
    %v747 = vld [vmem:[%s746] sm:$0x1]
    %v749 = vlaneseq
    %v750 = vshrl.u32 %v749, 7
    %v751 = vsub.s32 0, %v750
    %v752 = vrot.slane %v747, %v751
    %v754 = vadd.f32 %v745, %v752
    %v755 = vpack.c.bf16 %v754, %v754
    %s756 = scalar_lea.vmem %s3, 8
    %v757 = vld [vmem:[%s756] sm:$0xf]
    %v758 = vld [vmem:[%s756 + $0x4] sm:$0xf]
    %s759 = scalar_lea.vmem %s4, 1
    %v760 = vld [vmem:[%s759] sm:$0x1]
    %v762 = vlaneseq
    %v763 = vshrl.u32 %v762, 7
    %v764 = vsub.s32 0, %v763
    %v765 = vrot.slane %v760, %v764
    %v769 = vunpack.c.l.b16 %v757
    %v770 = vunpack.c.l.b16 %v758
    %v771 = vpack.c.b16 %v770, %v769
    %v774 = vsel %vm474, %v755, 0
    %776 = vmatprep.subr.bf16.mxu0 0
    %777 = vmatpush1.bf16.msra.mxu0 0
    %778 = vmatprep.subr.bf16.mxu0 0
    %779 = vmatpush1.bf16.msra.mxu0 0
    %780 = vmatprep.subr.bf16.mxu0 0
    %781 = vmatpush1.bf16.msra.mxu0 0
    %782 = vmatprep.subr.bf16.mxu0 0
    %783 = vmatpush1.bf16.msra.mxu0 0
    %784 = vmatprep.subr.bf16.mxu0 0
    %785 = vmatpush1.bf16.msra.mxu0 0
    %786 = vmatprep.subr.bf16.mxu0 0
    %787 = vmatpush1.bf16.msra.mxu0 0
    %788 = vmatprep.subr.bf16.mxu0 0
    %789 = vmatpush1.bf16.msra.mxu0 0
    %790 = vmatprep.subr.bf16.mxu0 0
    %791 = vmatpush1.bf16.msra.mxu0 %v771
    %792 = vmatprep.subr.bf16.mxu0 0
    %793 = vmatpush2.bf16.msra.mxu0 0
    %794 = vmatprep.subr.bf16.mxu0 0
    %795 = vmatpush2.bf16.msra.mxu0 0
    %796 = vmatprep.subr.bf16.mxu0 0
    %797 = vmatpush2.bf16.msra.mxu0 0
    %798 = vmatprep.subr.bf16.mxu0 0
    %799 = vmatpush2.bf16.msra.mxu0 0
    %800 = vmatprep.subr.bf16.mxu0 0
    %801 = vmatpush2.bf16.msra.mxu0 0
    %802 = vmatprep.subr.bf16.mxu0 0
    %803 = vmatpush2.bf16.msra.mxu0 0
    %804 = vmatprep.subr.bf16.mxu0 0
    %805 = vmatpush2.bf16.msra.mxu0 0
    %806 = vmatprep.subr.bf16.mxu0 0
    %807 = vmatpush2.bf16.msra.mxu0 0
    %808 = vmatprep.mubr.bf16.mxu0 0
    %809 = vmatmul.mubr.bf16.gmra.mxu0 %v774
    %v810 = vpop.f32.mrf.mxu0
    %v811 = vadd.f32 %v765, %v810
    %v812 = vpop.f32.mrf.mxu0
    %v813 = vpop.f32.mrf.mxu0
    %v814 = vpop.f32.mrf.mxu0
    %815 = vdwg.mxu0
    %v816 = vadd.f32 %v723, %v811
    %v817 = vsel %vm474, %v816, 0.0
    %818 = vadd.xlane.f32.xlu0 %v817
    %v819 = vpop.xlane.xlu0 %818
    %v820 = vmul.f32 %v819, %v478
    %v821 = vsub.f32 %v816, %v820
    %v822 = vmul.f32 %v821, %v821
    %v823 = vsel %vm474, %v822, 0.0
    %824 = vadd.xlane.f32.xlu0 %v823
    %v825 = vpop.xlane.xlu0 %824
    %v826 = vmul.f32 %v825, %v478
    %v827 = vadd.f32 %v826, 1e-05
    %v828 = vrsqrt.pop %v827
    %v829 = vmul.f32 %v821, %v828
    %s830 = scalar_lea.vmem %s7, 1
    %v831 = vld [vmem:[%s830] sm:$0x1]
    %v833 = vlaneseq
    %v834 = vshrl.u32 %v833, 7
    %v835 = vsub.s32 0, %v834
    %v836 = vrot.slane %v831, %v835
    %v838 = vmul.f32 %v829, %v836
    %s839 = scalar_lea.vmem %s8, 1
    %v840 = vld [vmem:[%s839] sm:$0x1]
    %v842 = vlaneseq
    %v843 = vshrl.u32 %v842, 7
    %v844 = vsub.s32 0, %v843
    %v845 = vrot.slane %v840, %v844
    %v847 = vadd.f32 %v838, %v845
    %v848 = vpack.c.bf16 %v847, %v847
    %s849 = scalar_lea.vmem %s9, 8
    %v850 = vld [vmem:[%s849] sm:$0xf]
    %v851 = vld [vmem:[%s849 + $0x4] sm:$0xf]
    %s852 = scalar_lea.vmem %s10, 1
    %v853 = vld [vmem:[%s852] sm:$0x1]
    %v855 = vlaneseq
    %v856 = vshrl.u32 %v855, 7
    %v857 = vsub.s32 0, %v856
    %v858 = vrot.slane %v853, %v857
    %v862 = vunpack.c.l.b16 %v850
    %v863 = vunpack.c.l.b16 %v851
    %v864 = vpack.c.b16 %v863, %v862
    %v867 = vsel %vm474, %v848, 0
    %869 = vmatprep.subr.bf16.mxu0 0
    %870 = vmatpush1.bf16.msra.mxu0 0
    %871 = vmatprep.subr.bf16.mxu0 0
    %872 = vmatpush1.bf16.msra.mxu0 0
    %873 = vmatprep.subr.bf16.mxu0 0
    %874 = vmatpush1.bf16.msra.mxu0 0
    %875 = vmatprep.subr.bf16.mxu0 0
    %876 = vmatpush1.bf16.msra.mxu0 0
    %877 = vmatprep.subr.bf16.mxu0 0
    %878 = vmatpush1.bf16.msra.mxu0 0
    %879 = vmatprep.subr.bf16.mxu0 0
    %880 = vmatpush1.bf16.msra.mxu0 0
    %881 = vmatprep.subr.bf16.mxu0 0
    %882 = vmatpush1.bf16.msra.mxu0 0
    %883 = vmatprep.subr.bf16.mxu0 0
    %884 = vmatpush1.bf16.msra.mxu0 %v864
    %885 = vmatprep.subr.bf16.mxu0 0
    %886 = vmatpush2.bf16.msra.mxu0 0
    %887 = vmatprep.subr.bf16.mxu0 0
    %888 = vmatpush2.bf16.msra.mxu0 0
    %889 = vmatprep.subr.bf16.mxu0 0
    %890 = vmatpush2.bf16.msra.mxu0 0
    %891 = vmatprep.subr.bf16.mxu0 0
    %892 = vmatpush2.bf16.msra.mxu0 0
    %893 = vmatprep.subr.bf16.mxu0 0
    %894 = vmatpush2.bf16.msra.mxu0 0
    %895 = vmatprep.subr.bf16.mxu0 0
    %896 = vmatpush2.bf16.msra.mxu0 0
    %897 = vmatprep.subr.bf16.mxu0 0
    %898 = vmatpush2.bf16.msra.mxu0 0
    %899 = vmatprep.subr.bf16.mxu0 0
    %900 = vmatpush2.bf16.msra.mxu0 0
    %901 = vmatprep.mubr.bf16.mxu0 0
    %902 = vmatmul.mubr.bf16.gmra.mxu0 %v867
    %v903 = vpop.f32.mrf.mxu0
    %v904 = vadd.f32 %v858, %v903
    %v905 = vpop.f32.mrf.mxu0
    %v906 = vpop.f32.mrf.mxu0
    %v907 = vpop.f32.mrf.mxu0
    %908 = vdwg.mxu0
    %v909 = vmax.f32 %v904, 0.0
    %v910 = vpack.c.bf16 %v909, %v909
    %s911 = scalar_lea.vmem %s11, 16
    %v912 = vld [vmem:[%s911] sm:$0xf]
    %v913 = vld [vmem:[%s911 + $0x4] sm:$0xf]
    %v914 = vld [vmem:[%s911 + $0x8] sm:$0xf]
    %v915 = vld [vmem:[%s911 + $0xc] sm:$0xf]
    %v920 = vunpack.c.l.b16 %v912
    %v921 = vunpack.c.l.b16 %v913
    %v922 = vunpack.c.l.b16 %v914
    %v923 = vunpack.c.l.b16 %v915
    %v924 = vpack.c.b16 %v921, %v920
    %v925 = vpack.c.b16 %v923, %v922
    %v929 = vsel %vm671, %v910, 0
    %931 = vmatprep.subr.bf16.mxu0 0
    %932 = vmatpush1.bf16.msra.mxu0 0
    %933 = vmatprep.subr.bf16.mxu0 0
    %934 = vmatpush1.bf16.msra.mxu0 0
    %935 = vmatprep.subr.bf16.mxu0 0
    %936 = vmatpush1.bf16.msra.mxu0 0
    %937 = vmatprep.subr.bf16.mxu0 0
    %938 = vmatpush1.bf16.msra.mxu0 0
    %939 = vmatprep.subr.bf16.mxu0 0
    %940 = vmatpush1.bf16.msra.mxu0 0
    %941 = vmatprep.subr.bf16.mxu0 0
    %942 = vmatpush1.bf16.msra.mxu0 0
    %943 = vmatprep.subr.bf16.mxu0 0
    %944 = vmatpush1.bf16.msra.mxu0 %v925
    %945 = vmatprep.subr.bf16.mxu0 0
    %946 = vmatpush1.bf16.msra.mxu0 %v924
    %947 = vmatprep.subr.bf16.mxu0 0
    %948 = vmatpush2.bf16.msra.mxu0 0
    %949 = vmatprep.subr.bf16.mxu0 0
    %950 = vmatpush2.bf16.msra.mxu0 0
    %951 = vmatprep.subr.bf16.mxu0 0
    %952 = vmatpush2.bf16.msra.mxu0 0
    %953 = vmatprep.subr.bf16.mxu0 0
    %954 = vmatpush2.bf16.msra.mxu0 0
    %955 = vmatprep.subr.bf16.mxu0 0
    %956 = vmatpush2.bf16.msra.mxu0 0
    %957 = vmatprep.subr.bf16.mxu0 0
    %958 = vmatpush2.bf16.msra.mxu0 0
    %959 = vmatprep.subr.bf16.mxu0 0
    %960 = vmatpush2.bf16.msra.mxu0 0
    %961 = vmatprep.subr.bf16.mxu0 0
    %962 = vmatpush2.bf16.msra.mxu0 0
    %963 = vmatprep.mubr.bf16.mxu0 0
    %964 = vmatmul.mubr.bf16.gmra.mxu0 %v929
    %v965 = vpop.f32.mrf.mxu0
    %v966 = vadd.f32 0.0, %v965
    %v967 = vpop.f32.mrf.mxu0
    %v968 = vpop.f32.mrf.mxu0
    %v969 = vpop.f32.mrf.mxu0
    %970 = vdwg.mxu0
    %v971 = vadd.f32 %v847, %v966
    %s972 = scalar_lea.vmem %s12, 1
    %v973 = vld [vmem:[%s972] sm:$0x1]
    %v975 = vlaneseq
    %v976 = vshrl.u32 %v975, 7
    %v977 = vsub.s32 0, %v976
    %v978 = vrot.slane %v973, %v977
    %v980 = vadd.f32 %v971, %v978
    %v981 = vpack.c.bf16 %v980, %v980
    %v982 = vld [vmem:[%s13] sm:$0xf]
    %v983 = vld [vmem:[%s13 + $0x4] sm:$0xf]
    %s984 = scalar_lea.vmem %s13, 8
    %v985 = vld [vmem:[%s984] sm:$0xf]
    %v986 = vld [vmem:[%s984 + $0x4] sm:$0xf]
    %v988 = vrot.slane %v981, 1
    %v991 = vunpack.c.l.b16 %v985
    %v992 = vunpack.c.l.b16 %v986
    %v993 = vpack.c.b16 %v992, %v991
    %v996 = vsel %vm474, %v988, 0
    %998 = vmatprep.subr.bf16.mxu0 0
    %999 = vmatpush1.bf16.msra.mxu0 0
    %1000 = vmatprep.subr.bf16.mxu0 0
    %1001 = vmatpush1.bf16.msra.mxu0 0
    %1002 = vmatprep.subr.bf16.mxu0 0
    %1003 = vmatpush1.bf16.msra.mxu0 0
    %1004 = vmatprep.subr.bf16.mxu0 0
    %1005 = vmatpush1.bf16.msra.mxu0 0
    %1006 = vmatprep.subr.bf16.mxu0 0
    %1007 = vmatpush1.bf16.msra.mxu0 0
    %1008 = vmatprep.subr.bf16.mxu0 0
    %1009 = vmatpush1.bf16.msra.mxu0 0
    %1010 = vmatprep.subr.bf16.mxu0 0
    %1011 = vmatpush1.bf16.msra.mxu0 0
    %1012 = vmatprep.subr.bf16.mxu0 0
    %1013 = vmatpush1.bf16.msra.mxu0 %v993
    %1014 = vmatprep.subr.bf16.mxu0 0
    %1015 = vmatpush2.bf16.msra.mxu0 0
    %1016 = vmatprep.subr.bf16.mxu0 0
    %1017 = vmatpush2.bf16.msra.mxu0 0
    %1018 = vmatprep.subr.bf16.mxu0 0
    %1019 = vmatpush2.bf16.msra.mxu0 0
    %1020 = vmatprep.subr.bf16.mxu0 0
    %1021 = vmatpush2.bf16.msra.mxu0 0
    %1022 = vmatprep.subr.bf16.mxu0 0
    %1023 = vmatpush2.bf16.msra.mxu0 0
    %1024 = vmatprep.subr.bf16.mxu0 0
    %1025 = vmatpush2.bf16.msra.mxu0 0
    %1026 = vmatprep.subr.bf16.mxu0 0
    %1027 = vmatpush2.bf16.msra.mxu0 0
    %1028 = vmatprep.subr.bf16.mxu0 0
    %1029 = vmatpush2.bf16.msra.mxu0 0
    %1030 = vmatprep.mubr.bf16.mxu0 0
    %1031 = vmatmul.mubr.bf16.gmra.mxu0 %v996
    %v1032 = vpop.f32.mrf.mxu0
    %v1033 = vadd.f32 0.0, %v1032
    %v1034 = vpop.f32.mrf.mxu0
    %v1035 = vpop.f32.mrf.mxu0
    %v1036 = vpop.f32.mrf.mxu0
    %1037 = vdwg.mxu0
    %v1040 = vunpack.c.l.b16 %v982
    %v1041 = vunpack.c.l.b16 %v983
    %v1042 = vpack.c.b16 %v1041, %v1040
    %v1045 = vsel %vm474, %v981, 0
    %1047 = vmatprep.subr.bf16.mxu0 0
    %1048 = vmatpush1.bf16.msra.mxu0 0
    %1049 = vmatprep.subr.bf16.mxu0 0
    %1050 = vmatpush1.bf16.msra.mxu0 0
    %1051 = vmatprep.subr.bf16.mxu0 0
    %1052 = vmatpush1.bf16.msra.mxu0 0
    %1053 = vmatprep.subr.bf16.mxu0 0
    %1054 = vmatpush1.bf16.msra.mxu0 0
    %1055 = vmatprep.subr.bf16.mxu0 0
    %1056 = vmatpush1.bf16.msra.mxu0 0
    %1057 = vmatprep.subr.bf16.mxu0 0
    %1058 = vmatpush1.bf16.msra.mxu0 0
    %1059 = vmatprep.subr.bf16.mxu0 0
    %1060 = vmatpush1.bf16.msra.mxu0 0
    %1061 = vmatprep.subr.bf16.mxu0 0
    %1062 = vmatpush1.bf16.msra.mxu0 %v1042
    %1063 = vmatprep.subr.bf16.mxu0 0
    %1064 = vmatpush2.bf16.msra.mxu0 0
    %1065 = vmatprep.subr.bf16.mxu0 0
    %1066 = vmatpush2.bf16.msra.mxu0 0
    %1067 = vmatprep.subr.bf16.mxu0 0
    %1068 = vmatpush2.bf16.msra.mxu0 0
    %1069 = vmatprep.subr.bf16.mxu0 0
    %1070 = vmatpush2.bf16.msra.mxu0 0
    %1071 = vmatprep.subr.bf16.mxu0 0
    %1072 = vmatpush2.bf16.msra.mxu0 0
    %1073 = vmatprep.subr.bf16.mxu0 0
    %1074 = vmatpush2.bf16.msra.mxu0 0
    %1075 = vmatprep.subr.bf16.mxu0 0
    %1076 = vmatpush2.bf16.msra.mxu0 0
    %1077 = vmatprep.subr.bf16.mxu0 0
    %1078 = vmatpush2.bf16.msra.mxu0 0
    %1079 = vmatprep.mubr.bf16.mxu0 0
    %1080 = vmatmul.mubr.bf16.gmra.mxu0 %v1045
    %v1081 = vpop.f32.mrf.mxu0
    %v1082 = vadd.f32 %v1033, %v1081
    %v1083 = vpop.f32.mrf.mxu0
    %v1084 = vpop.f32.mrf.mxu0
    %v1085 = vpop.f32.mrf.mxu0
    %1086 = vdwg.mxu0
    %s1087 = scalar_lea.vmem %s13, 16
    %v1088 = vld [vmem:[%s1087] sm:$0xf]
    %v1089 = vld [vmem:[%s1087 + $0x4] sm:$0xf]
    %v1090 = vrot.slane %v981, 2
    %v1093 = vunpack.c.l.b16 %v1088
    %v1094 = vunpack.c.l.b16 %v1089
    %v1095 = vpack.c.b16 %v1094, %v1093
    %v1098 = vsel %vm474, %v1090, 0
    %1100 = vmatprep.subr.bf16.mxu0 0
    %1101 = vmatpush1.bf16.msra.mxu0 0
    %1102 = vmatprep.subr.bf16.mxu0 0
    %1103 = vmatpush1.bf16.msra.mxu0 0
    %1104 = vmatprep.subr.bf16.mxu0 0
    %1105 = vmatpush1.bf16.msra.mxu0 0
    %1106 = vmatprep.subr.bf16.mxu0 0
    %1107 = vmatpush1.bf16.msra.mxu0 0
    %1108 = vmatprep.subr.bf16.mxu0 0
    %1109 = vmatpush1.bf16.msra.mxu0 0
    %1110 = vmatprep.subr.bf16.mxu0 0
    %1111 = vmatpush1.bf16.msra.mxu0 0
    %1112 = vmatprep.subr.bf16.mxu0 0
    %1113 = vmatpush1.bf16.msra.mxu0 0
    %1114 = vmatprep.subr.bf16.mxu0 0
    %1115 = vmatpush1.bf16.msra.mxu0 %v1095
    %1116 = vmatprep.subr.bf16.mxu0 0
    %1117 = vmatpush2.bf16.msra.mxu0 0
    %1118 = vmatprep.subr.bf16.mxu0 0
    %1119 = vmatpush2.bf16.msra.mxu0 0
    %1120 = vmatprep.subr.bf16.mxu0 0
    %1121 = vmatpush2.bf16.msra.mxu0 0
    %1122 = vmatprep.subr.bf16.mxu0 0
    %1123 = vmatpush2.bf16.msra.mxu0 0
    %1124 = vmatprep.subr.bf16.mxu0 0
    %1125 = vmatpush2.bf16.msra.mxu0 0
    %1126 = vmatprep.subr.bf16.mxu0 0
    %1127 = vmatpush2.bf16.msra.mxu0 0
    %1128 = vmatprep.subr.bf16.mxu0 0
    %1129 = vmatpush2.bf16.msra.mxu0 0
    %1130 = vmatprep.subr.bf16.mxu0 0
    %1131 = vmatpush2.bf16.msra.mxu0 0
    %1132 = vmatprep.mubr.bf16.mxu0 0
    %1133 = vmatmul.mubr.bf16.gmra.mxu0 %v1098
    %v1134 = vpop.f32.mrf.mxu0
    %v1135 = vadd.f32 0.0, %v1134
    %v1136 = vpop.f32.mrf.mxu0
    %v1137 = vpop.f32.mrf.mxu0
    %v1138 = vpop.f32.mrf.mxu0
    %1139 = vdwg.mxu0
    %v1140 = vadd.f32 %v1082, %v1135
    %s1141 = scalar_lea.vmem %s13, 24
    %v1142 = vld [vmem:[%s1141] sm:$0xf]
    %v1143 = vld [vmem:[%s1141 + $0x4] sm:$0xf]
    %v1144 = vrot.slane %v981, 3
    %v1147 = vunpack.c.l.b16 %v1142
    %v1148 = vunpack.c.l.b16 %v1143
    %v1149 = vpack.c.b16 %v1148, %v1147
    %v1152 = vsel %vm474, %v1144, 0
    %1154 = vmatprep.subr.bf16.mxu0 0
    %1155 = vmatpush1.bf16.msra.mxu0 0
    %1156 = vmatprep.subr.bf16.mxu0 0
    %1157 = vmatpush1.bf16.msra.mxu0 0
    %1158 = vmatprep.subr.bf16.mxu0 0
    %1159 = vmatpush1.bf16.msra.mxu0 0
    %1160 = vmatprep.subr.bf16.mxu0 0
    %1161 = vmatpush1.bf16.msra.mxu0 0
    %1162 = vmatprep.subr.bf16.mxu0 0
    %1163 = vmatpush1.bf16.msra.mxu0 0
    %1164 = vmatprep.subr.bf16.mxu0 0
    %1165 = vmatpush1.bf16.msra.mxu0 0
    %1166 = vmatprep.subr.bf16.mxu0 0
    %1167 = vmatpush1.bf16.msra.mxu0 0
    %1168 = vmatprep.subr.bf16.mxu0 0
    %1169 = vmatpush1.bf16.msra.mxu0 %v1149
    %1170 = vmatprep.subr.bf16.mxu0 0
    %1171 = vmatpush2.bf16.msra.mxu0 0
    %1172 = vmatprep.subr.bf16.mxu0 0
    %1173 = vmatpush2.bf16.msra.mxu0 0
    %1174 = vmatprep.subr.bf16.mxu0 0
    %1175 = vmatpush2.bf16.msra.mxu0 0
    %1176 = vmatprep.subr.bf16.mxu0 0
    %1177 = vmatpush2.bf16.msra.mxu0 0
    %1178 = vmatprep.subr.bf16.mxu0 0
    %1179 = vmatpush2.bf16.msra.mxu0 0
    %1180 = vmatprep.subr.bf16.mxu0 0
    %1181 = vmatpush2.bf16.msra.mxu0 0
    %1182 = vmatprep.subr.bf16.mxu0 0
    %1183 = vmatpush2.bf16.msra.mxu0 0
    %1184 = vmatprep.subr.bf16.mxu0 0
    %1185 = vmatpush2.bf16.msra.mxu0 0
    %1186 = vmatprep.mubr.bf16.mxu0 0
    %1187 = vmatmul.mubr.bf16.gmra.mxu0 %v1152
    %v1188 = vpop.f32.mrf.mxu0
    %v1189 = vadd.f32 0.0, %v1188
    %v1190 = vpop.f32.mrf.mxu0
    %v1191 = vpop.f32.mrf.mxu0
    %v1192 = vpop.f32.mrf.mxu0
    %1193 = vdwg.mxu0
    %v1194 = vadd.f32 %v1140, %v1189
    %v1195 = vld [vmem:[%s14] sm:$0x1]
    %v1197 = vlaneseq
    %v1198 = vshrl.u32 %v1197, 7
    %v1199 = vsub.s32 0, %v1198
    %v1200 = vrot.slane %v1195, %v1199
    %v1202 = vadd.f32 %v1194, %v1200
    %v1203 = vmax.f32 %v1202, 0.0
    %v1204 = vpack.c.bf16 %v1203, %v1203
    %v1205 = vld [vmem:[%s15] sm:$0xf]
    %v1206 = vld [vmem:[%s16] sm:$0x1]
    %v1208 = vlaneseq
    %v1209 = vshrl.u32 %v1208, 7
    %v1210 = vsub.s32 0, %v1209
    %v1211 = vrot.slane %v1206, %v1210
    %vm1213 = vcmask 64512
    %v1215 = vsel %vm1213, %v1204, 0
    %v1218 = vsel %vm470, %v1205, 0
    %1220 = vmatprep.subr.bf16.mxu0 0
    %1221 = vmatpush1.bf16.msra.mxu0 0
    %1222 = vmatprep.subr.bf16.mxu0 0
    %1223 = vmatpush1.bf16.msra.mxu0 0
    %1224 = vmatprep.subr.bf16.mxu0 0
    %1225 = vmatpush1.bf16.msra.mxu0 0
    %1226 = vmatprep.subr.bf16.mxu0 0
    %1227 = vmatpush1.bf16.msra.mxu0 0
    %1228 = vmatprep.subr.bf16.mxu0 0
    %1229 = vmatpush1.bf16.msra.mxu0 0
    %1230 = vmatprep.subr.bf16.mxu0 0
    %1231 = vmatpush1.bf16.msra.mxu0 0
    %1232 = vmatprep.subr.bf16.mxu0 0
    %1233 = vmatpush1.bf16.msra.mxu0 0
    %1234 = vmatprep.subr.bf16.mxu0 0
    %1235 = vmatpush1.bf16.msra.mxu0 %v1218
    %1236 = vmatprep.subr.bf16.mxu0 0
    %1237 = vmatpush2.bf16.msra.mxu0 0
    %1238 = vmatprep.subr.bf16.mxu0 0
    %1239 = vmatpush2.bf16.msra.mxu0 0
    %1240 = vmatprep.subr.bf16.mxu0 0
    %1241 = vmatpush2.bf16.msra.mxu0 0
    %1242 = vmatprep.subr.bf16.mxu0 0
    %1243 = vmatpush2.bf16.msra.mxu0 0
    %1244 = vmatprep.subr.bf16.mxu0 0
    %1245 = vmatpush2.bf16.msra.mxu0 0
    %1246 = vmatprep.subr.bf16.mxu0 0
    %1247 = vmatpush2.bf16.msra.mxu0 0
    %1248 = vmatprep.subr.bf16.mxu0 0
    %1249 = vmatpush2.bf16.msra.mxu0 0
    %1250 = vmatprep.subr.bf16.mxu0 0
    %1251 = vmatpush2.bf16.msra.mxu0 0
    %1252 = vmatprep.mubr.bf16.mxu0 0
    %1253 = vmatmul.mubr.bf16.gmra.mxu0 %v1215
    %v1254 = vpop.f32.mrf.mxu0
    %v1255 = vadd.f32 %v1211, %v1254
    %v1256 = vpop.f32.mrf.mxu0
    %v1257 = vpop.f32.mrf.mxu0
    %v1258 = vpop.f32.mrf.mxu0
    %1259 = vdwg.mxu0
    %v1260 = vmax.f32 %v1255, 0.0
    %v1261 = vpack.c.bf16 %v1260, %v1260
    %v1262 = vld [vmem:[%s17] sm:$0x3]
    %v1263 = vld [vmem:[#allocation2] sm:$0x1]
    %v1265 = vlaneseq
    %v1266 = vshrl.u32 %v1265, 7
    %v1267 = vsub.s32 0, %v1266
    %v1268 = vrot.slane %v1263, %v1267
    %vm1270 = vcmask 31744
    %v1272 = vsel %vm1270, %v1261, 0
    %v1275 = vsel %vm468, %v1262, 0
    %1277 = vmatprep.subr.bf16.mxu0 0
    %1278 = vmatpush1.bf16.msra.mxu0 0
    %1279 = vmatprep.subr.bf16.mxu0 0
    %1280 = vmatpush1.bf16.msra.mxu0 0
    %1281 = vmatprep.subr.bf16.mxu0 0
    %1282 = vmatpush1.bf16.msra.mxu0 0
    %1283 = vmatprep.subr.bf16.mxu0 0
    %1284 = vmatpush1.bf16.msra.mxu0 0
    %1285 = vmatprep.subr.bf16.mxu0 0
    %1286 = vmatpush1.bf16.msra.mxu0 0
    %1287 = vmatprep.subr.bf16.mxu0 0
    %1288 = vmatpush1.bf16.msra.mxu0 0
    %1289 = vmatprep.subr.bf16.mxu0 0
    %1290 = vmatpush1.bf16.msra.mxu0 0
    %1291 = vmatprep.subr.bf16.mxu0 0
    %1292 = vmatpush1.bf16.msra.mxu0 %v1275
    %1293 = vmatprep.subr.bf16.mxu0 0
    %1294 = vmatpush2.bf16.msra.mxu0 0
    %1295 = vmatprep.subr.bf16.mxu0 0
    %1296 = vmatpush2.bf16.msra.mxu0 0
    %1297 = vmatprep.subr.bf16.mxu0 0
    %1298 = vmatpush2.bf16.msra.mxu0 0
    %1299 = vmatprep.subr.bf16.mxu0 0
    %1300 = vmatpush2.bf16.msra.mxu0 0
    %1301 = vmatprep.subr.bf16.mxu0 0
    %1302 = vmatpush2.bf16.msra.mxu0 0
    %1303 = vmatprep.subr.bf16.mxu0 0
    %1304 = vmatpush2.bf16.msra.mxu0 0
    %1305 = vmatprep.subr.bf16.mxu0 0
    %1306 = vmatpush2.bf16.msra.mxu0 0
    %1307 = vmatprep.subr.bf16.mxu0 0
    %1308 = vmatpush2.bf16.msra.mxu0 0
    %1309 = vmatprep.mubr.bf16.mxu0 0
    %1310 = vmatmul.mubr.bf16.gmra.mxu0 %v1272
    %v1311 = vpop.f32.mrf.mxu0
    %v1312 = vadd.f32 %v1268, %v1311
    %v1313 = vpop.f32.mrf.mxu0
    %v1314 = vpop.f32.mrf.mxu0
    %v1315 = vpop.f32.mrf.mxu0
    %1316 = vdwg.mxu0
    %vm1317 = vcmask 1024
    %1318 = vst.msk [vmem:[%s19] sm:$0x3] %vm1317, %v1312
    // Predicated region
    $region86: #{nfed_forward.1} parent=1 // pred_check
      _
    $region87: #{nfed_forward.1} parent=1 // pred_check_branch
      %1320 = sbr.rel (0) target = $region89
    $region88: #{nfed_forward.1} parent=1 // pred_region
      _
    $region89: #{nfed_forward.1} parent=1 // pred_fallthru
      _
    // Predicated region
    $region90: #{nfed_forward.1} parent=1 // pred_check
      _
    $region91: #{nfed_forward.1} parent=1 // pred_check_branch
      %1322 = sbr.rel (0) target = $region93
    $region92: #{nfed_forward.1} parent=1 // pred_region
      _
    $region93: #{nfed_forward.1} parent=1 // pred_fallthru
      _
    %1323 = vsyncpa [#allocation4], 1
    %1324 = vsyncpa [#allocation6], 1

</llo_original>
